<compile_context>
chip_gen: v7x
topology: tpu7x:2x2x1
jax: 0.10.0
libtpu: 0.0.40
codegen_flags: <defaults>
</compile_context>

<pallas_src>
import functools

import jax
import jax.numpy as jnp
import numpy as np
from jax import lax
from jax.experimental import pallas as pl
from jax.experimental.pallas import tpu as pltpu


# ----------------------------------------------------------------------------
# Fused forward kernel.
#   gen_ids : (S*B,  1) int32  time-major-flat token ids of `gen`   (row = t*B  + b)
#   lr_ids  : (S*2B, 1) int32  time-major-flat ids of stacked [left ; flip(right)]
#                              (row = t*2B + m ; m<B -> left, m>=B -> right)
#   weights stored (in, out); gate order (i, f, g, o) matches torch.nn.LSTM.
# ----------------------------------------------------------------------------
def _rcnn_kernel(gen_ids_ref, lr_ids_ref, emb_ref, wih_t_ref, whh_t_ref, b_ref,
                 w1g_ref, w1l_ref, w1r_ref, b1_ref, w2r_ref, b2_ref,
                 out_ref, hsl_ref, hsr_ref, *, B, S, H, VOCAB):
    B2 = 2 * B
    G4 = 4 * H

    emb = emb_ref[...]                                       # (V, E)
    whh_t = whh_t_ref[...]                                   # (H, 4H)

    # ---- in-kernel embedding lookup fused into the input projection --------
    # Pre-project the (tiny, frozen) embedding table once, then one-hot-select
    # rows with a single MXU matmul: (S*2B, V) @ (V, 4H).  Hoisted off the
    # serial chain; the recurrence only does h @ W_hh.
    emb_gates = jnp.dot(emb, wih_t_ref[...],
                        preferred_element_type=jnp.float32)          # (V, 4H)
    lr_rows = S * B2
    lr_iota = lax.broadcasted_iota(jnp.int32, (lr_rows, VOCAB), 1)
    lr_onehot = jnp.where(lr_ids_ref[...] == lr_iota, 1.0, 0.0)      # (S*2B, V)
    xg = jnp.dot(lr_onehot, emb_gates,
                 preferred_element_type=jnp.float32) + b_ref[...]    # (S*2B, 4H)

    # Single-sigmoid gate trick constants (hoisted): tanh(x) = 2*sigmoid(2x)-1
    # applied only on the g-gate lane block.
    lane = lax.broadcasted_iota(jnp.int32, (1, G4), 1)
    is_g = (lane >= 2 * H) & (lane < 3 * H)
    gmul = jnp.where(is_g, 2.0, 1.0)                          # (1, 4H)
    gadd = jnp.where(is_g, -1.0, 0.0)                         # (1, 4H)

    h = jnp.zeros((B2, H), jnp.float32)
    c = jnp.zeros((B2, H), jnp.float32)

    # Serial recurrence: per step one (2B,H)@(H,4H) matmul, ONE full-width
    # sigmoid pass, elementwise cell update, tanh(c), and two tiny scratch
    # stores.  S is small -> fully static unroll.
    for t in range(S):
        xg_t = xg[t * B2:(t + 1) * B2]                        # static slice (2B,4H)
        gates = jnp.dot(h, whh_t, preferred_element_type=jnp.float32) + xg_t
        sig = jax.nn.sigmoid(gates * gmul)                    # one EUP pass, 4H lanes
        acts = sig * gmul + gadd                              # i,f,o = sigmoid ; g = tanh
        i = acts[:, 0 * H:1 * H]
        f = acts[:, 1 * H:2 * H]
        g = acts[:, 2 * H:3 * H]
        o = acts[:, 3 * H:4 * H]
        c = f * c + i * g
        h = o * jnp.tanh(c)
        # Rows 0..B-1 are the left LSTM; rows B..2B-1 are the right LSTM fed in
        # reversed batch order (realizes torch.flip(right_out, [0]) for free).
        hsl_ref[t * B:(t + 1) * B, :] = h[:B]
        hsr_ref[t * B:(t + 1) * B, :] = h[B:]

    # ---- deferred dense1 / tanh / max head (off the serial chain) ----------
    emb_gd = jnp.dot(emb, w1g_ref[...],
                     preferred_element_type=jnp.float32)              # (V, D)
    gen_rows = S * B
    g_iota = lax.broadcasted_iota(jnp.int32, (gen_rows, VOCAB), 1)
    gen_onehot = jnp.where(gen_ids_ref[...] == g_iota, 1.0, 0.0)      # (S*B, V)
    gd = jnp.dot(gen_onehot, emb_gd,
                 preferred_element_type=jnp.float32) + b1_ref[...]    # (S*B, D)

    dl = jnp.dot(hsl_ref[...], w1l_ref[...], preferred_element_type=jnp.float32)
    dr = jnp.dot(hsr_ref[...], w1r_ref[...], preferred_element_type=jnp.float32)
    z = jnp.tanh(gd + dl + dr)                                        # (S*B, D)

    pooled = z[0:B]                                                   # (B, D)
    for t in range(1, S):
        pooled = jnp.maximum(pooled, z[t * B:(t + 1) * B])

    # Final dense on the VPU/XLU: broadcast-mul + lane-sum instead of a
    # 1-output-lane MXU matmul; scalar bias lives in SMEM.
    logits = jnp.sum(pooled * w2r_ref[...], axis=-1, keepdims=True) + b2_ref[0, 0]
    out_ref[...] = jax.nn.sigmoid(logits)                             # (B, 1)


def rcnn_forward(params, gen, left, right):
    emb = params['embed'].astype(jnp.float32)
    VOCAB, E = emb.shape
    H = params['w_hh'].shape[1]
    B, S = gen.shape

    # Layout plumbing on the *tiny int32 id* arrays only (essentially free):
    #  - time-major flattening so the kernel sees dense 2-D slabs,
    #  - right ids reversed along batch so the batch flip of right_out is free.
    gen_ids = gen.T.reshape(S * B, 1).astype(jnp.int32)               # (S*B, 1)
    lr_ids = jnp.concatenate([left, right[::-1]], axis=0)             # (2B, S)
    lr_ids = lr_ids.T.reshape(S * 2 * B, 1).astype(jnp.int32)         # (S*2B, 1)

    wih_t = params['w_ih'].T.astype(jnp.float32)                      # (E, 4H)
    whh_t = params['w_hh'].T.astype(jnp.float32)                      # (H, 4H)
    b = (params['b_ih'] + params['b_hh']).reshape(1, -1).astype(jnp.float32)

    w1 = params['w1'].astype(jnp.float32)                             # (E+2H, D)
    w1g, w1l, w1r = w1[:E], w1[E:E + H], w1[E + H:]
    b1 = params['b1'].reshape(1, -1).astype(jnp.float32)              # (1, D)
    w2r = params['w2'].reshape(1, -1).astype(jnp.float32)             # (1, D)
    b2 = params['b2'].reshape(1, 1).astype(jnp.float32)               # (1, 1)

    vmem = pl.BlockSpec(memory_space=pltpu.MemorySpace.VMEM)
    smem = pl.BlockSpec(memory_space=pltpu.MemorySpace.SMEM)

    out = pl.pallas_call(
        functools.partial(_rcnn_kernel, B=B, S=S, H=H, VOCAB=VOCAB),
        out_shape=jax.ShapeDtypeStruct((B, 1), jnp.float32),
        in_specs=[vmem] * 11 + [smem],
        out_specs=vmem,
        scratch_shapes=[pltpu.VMEM((S * B, H), jnp.float32),   # left  h sequence
                        pltpu.VMEM((S * B, H), jnp.float32)],  # right h sequence
        # Everything is whole-array VMEM-resident (no grid); buffers total a few
        # KB — document/enforce the ceiling explicitly (v7x has 64 MiB VMEM).
        compiler_params=pltpu.CompilerParams(vmem_limit_bytes=16 * 1024 * 1024),
    )(gen_ids, lr_ids, emb, wih_t, whh_t, b, w1g, w1l, w1r, b1, w2r, b2)
    return out


# ----------------------------------------------------------------------------
# Pure-JAX reference (mirrors the PyTorch forward, incl. the batch flip).
# ----------------------------------------------------------------------------
def rcnn_reference(params, gen, left, right):
    emb = params['embed']
    H = params['w_hh'].shape[1]
    wih_t, whh_t = params['w_ih'].T, params['w_hh'].T
    b = params['b_ih'] + params['b_hh']

    def lstm_ref(x):
        B = x.shape[0]

        def step(carry, x_t):
            h, c = carry
            gates = x_t @ wih_t + h @ whh_t + b
            i = jax.nn.sigmoid(gates[:, :H])
            f = jax.nn.sigmoid(gates[:, H:2 * H])
            g = jnp.tanh(gates[:, 2 * H:3 * H])
            o = jax.nn.sigmoid(gates[:, 3 * H:])
            c = f * c + i * g
            h = o * jnp.tanh(c)
            return (h, c), h

        carry0 = (jnp.zeros((B, H), jnp.float32), jnp.zeros((B, H), jnp.float32))
        _, ys = lax.scan(step, carry0, jnp.transpose(x, (1, 0, 2)))
        return jnp.transpose(ys, (1, 0, 2))

    gen_out = jnp.take(emb, gen, axis=0)
    left_out = lstm_ref(jnp.take(emb, left, axis=0))
    right_out = jnp.flip(lstm_ref(jnp.take(emb, right, axis=0)), axis=0)
    concat = jnp.concatenate([gen_out, left_out, right_out], axis=-1)
    h = jnp.tanh(concat @ params['w1'] + params['b1'])
    pooled = jnp.max(h, axis=1)
    return jax.nn.sigmoid(pooled @ params['w2'] + params['b2'])


if __name__ == "__main__":
    VOCAB, E, H, D = 20, 32, 32, 32          # embed_dim, lstm_hidden, dense_hidden
    B, S = 2, 8

    key = jax.random.PRNGKey(0)
    keys = jax.random.split(key, 10)
    params = {
        'embed': 0.5 * jax.random.normal(keys[0], (VOCAB, E), jnp.float32),
        'w_ih': 0.2 * jax.random.normal(keys[1], (4 * H, E), jnp.float32),
        'w_hh': 0.2 * jax.random.normal(keys[2], (4 * H, H), jnp.float32),
        'b_ih': 0.1 * jax.random.normal(keys[3], (4 * H,), jnp.float32),
        'b_hh': 0.1 * jax.random.normal(keys[4], (4 * H,), jnp.float32),
        'w1': 0.2 * jax.random.normal(keys[5], (E + 2 * H, D), jnp.float32),
        'b1': 0.1 * jax.random.normal(keys[6], (D,), jnp.float32),
        'w2': 0.2 * jax.random.normal(keys[7], (D, 1), jnp.float32),
        'b2': 0.1 * jax.random.normal(keys[8], (1,), jnp.float32),
    }

    ik = jax.random.split(keys[9], 3)
    gen = jax.random.randint(ik[0], (B, S), 0, VOCAB, dtype=jnp.int32)
    left = jax.random.randint(ik[1], (B, S), 0, VOCAB, dtype=jnp.int32)
    right = jax.random.randint(ik[2], (B, S), 0, VOCAB, dtype=jnp.int32)

    out = jax.block_until_ready(rcnn_forward(params, gen, left, right))
    ref = jax.block_until_ready(rcnn_reference(params, gen, left, right))

    assert out.shape == (B, 1), out.shape
    np.testing.assert_allclose(np.asarray(out), np.asarray(ref), atol=1e-3, rtol=1e-3)
    print("KERNEL_OK")
</pallas_src>

<mosaic_0001>
module attributes {stable_mosaic.version = 11 : i64} {
  func.func @_rcnn_kernel(%arg0: memref<16x1xi32, #tpu.memory_space<vmem>>, %arg1: memref<32x1xi32, #tpu.memory_space<vmem>>, %arg2: memref<20x32xf32, #tpu.memory_space<vmem>>, %arg3: memref<32x128xf32, #tpu.memory_space<vmem>>, %arg4: memref<32x128xf32, #tpu.memory_space<vmem>>, %arg5: memref<1x128xf32, #tpu.memory_space<vmem>>, %arg6: memref<32x32xf32, #tpu.memory_space<vmem>>, %arg7: memref<32x32xf32, #tpu.memory_space<vmem>>, %arg8: memref<32x32xf32, #tpu.memory_space<vmem>>, %arg9: memref<1x32xf32, #tpu.memory_space<vmem>>, %arg10: memref<1x32xf32, #tpu.memory_space<vmem>>, %arg11: memref<1x1xf32, #tpu.memory_space<smem>>, %arg12: memref<2x1xf32, #tpu.memory_space<vmem>>, %arg13: memref<16x32xf32, #tpu.memory_space<vmem>>, %arg14: memref<16x32xf32, #tpu.memory_space<vmem>>) attributes {dimension_semantics = [], scalar_prefetch = 0 : i64, scratch_operands = 2 : i64, tpu.core_type = #tpu.core_type<tc>} {
    %c0 = arith.constant 0 : index
    %c0_0 = arith.constant 0 : index
    %0 = vector.load %arg2[%c0, %c0_0] : memref<20x32xf32, #tpu.memory_space<vmem>>, vector<20x32xf32>
    %c0_1 = arith.constant 0 : index
    %c0_2 = arith.constant 0 : index
    %1 = vector.load %arg4[%c0_1, %c0_2] : memref<32x128xf32, #tpu.memory_space<vmem>>, vector<32x128xf32>
    %c0_3 = arith.constant 0 : index
    %c0_4 = arith.constant 0 : index
    %2 = vector.load %arg3[%c0_3, %c0_4] : memref<32x128xf32, #tpu.memory_space<vmem>>, vector<32x128xf32>
    %cst = arith.constant dense<0.000000e+00> : vector<20x128xf32>
    %3 = tpu.matmul %0, %2, %cst {dimension_numbers = #tpu.dot_dimension_numbers<[1], [0], [0], [1], [0, 0, 1, 1], [], []>} : vector<20x32xf32>, vector<32x128xf32>, vector<20x128xf32> -> vector<20x128xf32>
    %4 = tpu.iota {dimensions = array<i32: 1>} : vector<32x20xi32>
    %c0_5 = arith.constant 0 : index
    %c0_6 = arith.constant 0 : index
    %5 = vector.load %arg1[%c0_5, %c0_6] : memref<32x1xi32, #tpu.memory_space<vmem>>, vector<32x1xi32>
    %6 = vector.broadcast %5 : vector<32x1xi32> to vector<32x20xi32>
    %7 = arith.cmpi eq, %6, %4 : vector<32x20xi32>
    %cst_7 = arith.constant 1.000000e+00 : f32
    %cst_8 = arith.constant 0.000000e+00 : f32
    %8 = vector.broadcast %cst_7 : f32 to vector<32x20xf32>
    %9 = vector.broadcast %cst_8 : f32 to vector<32x20xf32>
    %10 = arith.select %7, %8, %9 : vector<32x20xi1>, vector<32x20xf32>
    %cst_9 = arith.constant dense<0.000000e+00> : vector<32x128xf32>
    %11 = tpu.matmul %10, %3, %cst_9 {dimension_numbers = #tpu.dot_dimension_numbers<[1], [0], [0], [1], [0, 0, 1, 1], [], []>} : vector<32x20xf32>, vector<20x128xf32>, vector<32x128xf32> -> vector<32x128xf32>
    %c0_10 = arith.constant 0 : index
    %c0_11 = arith.constant 0 : index
    %12 = vector.load %arg5[%c0_10, %c0_11] : memref<1x128xf32, #tpu.memory_space<vmem>>, vector<1x128xf32>
    %13 = vector.broadcast %12 : vector<1x128xf32> to vector<32x128xf32>
    %14 = arith.addf %11, %13 : vector<32x128xf32>
    %15 = tpu.iota {dimensions = array<i32: 1>} : vector<1x128xi32>
    %c64_i32 = arith.constant 64 : i32
    %16 = vector.broadcast %c64_i32 : i32 to vector<1x128xi32>
    %17 = arith.cmpi sge, %15, %16 : vector<1x128xi32>
    %c96_i32 = arith.constant 96 : i32
    %18 = vector.broadcast %c96_i32 : i32 to vector<1x128xi32>
    %19 = arith.cmpi slt, %15, %18 : vector<1x128xi32>
    %20 = arith.andi %17, %19 : vector<1x128xi1>
    %cst_12 = arith.constant 2.000000e+00 : f32
    %cst_13 = arith.constant 1.000000e+00 : f32
    %21 = vector.broadcast %cst_12 : f32 to vector<1x128xf32>
    %22 = vector.broadcast %cst_13 : f32 to vector<1x128xf32>
    %23 = arith.select %20, %21, %22 : vector<1x128xi1>, vector<1x128xf32>
    %cst_14 = arith.constant -1.000000e+00 : f32
    %cst_15 = arith.constant 0.000000e+00 : f32
    %24 = vector.broadcast %cst_14 : f32 to vector<1x128xf32>
    %25 = vector.broadcast %cst_15 : f32 to vector<1x128xf32>
    %26 = arith.select %20, %24, %25 : vector<1x128xi1>, vector<1x128xf32>
    %cst_16 = arith.constant 0.000000e+00 : f32
    %27 = vector.broadcast %cst_16 : f32 to vector<4x32xf32>
    %cst_17 = arith.constant 0.000000e+00 : f32
    %28 = vector.broadcast %cst_17 : f32 to vector<4x32xf32>
    %29 = vector.extract_strided_slice %14 {offsets = [0, 0], sizes = [4, 128], strides = [1, 1]} : vector<32x128xf32> to vector<4x128xf32>
    %cst_18 = arith.constant dense<0.000000e+00> : vector<4x128xf32>
    %30 = tpu.matmul %27, %1, %cst_18 {dimension_numbers = #tpu.dot_dimension_numbers<[1], [0], [0], [1], [0, 0, 1, 1], [], []>} : vector<4x32xf32>, vector<32x128xf32>, vector<4x128xf32> -> vector<4x128xf32>
    %31 = arith.addf %30, %29 : vector<4x128xf32>
    %32 = vector.broadcast %23 : vector<1x128xf32> to vector<4x128xf32>
    %33 = arith.mulf %31, %32 : vector<4x128xf32>
    %34 = arith.negf %33 : vector<4x128xf32>
    %35 = math.exp %34 : vector<4x128xf32>
    %cst_19 = arith.constant 1.000000e+00 : f32
    %36 = vector.broadcast %cst_19 : f32 to vector<4x128xf32>
    %37 = arith.addf %36, %35 : vector<4x128xf32>
    %38 = arith.divf %36, %37 : vector<4x128xf32>
    %39 = vector.broadcast %23 : vector<1x128xf32> to vector<4x128xf32>
    %40 = arith.mulf %38, %39 : vector<4x128xf32>
    %41 = vector.broadcast %26 : vector<1x128xf32> to vector<4x128xf32>
    %42 = arith.addf %40, %41 : vector<4x128xf32>
    %43 = vector.extract_strided_slice %42 {offsets = [0, 0], sizes = [4, 32], strides = [1, 1]} : vector<4x128xf32> to vector<4x32xf32>
    %44 = vector.extract_strided_slice %42 {offsets = [0, 32], sizes = [4, 32], strides = [1, 1]} : vector<4x128xf32> to vector<4x32xf32>
    %45 = vector.extract_strided_slice %42 {offsets = [0, 64], sizes = [4, 32], strides = [1, 1]} : vector<4x128xf32> to vector<4x32xf32>
    %46 = vector.extract_strided_slice %42 {offsets = [0, 96], sizes = [4, 32], strides = [1, 1]} : vector<4x128xf32> to vector<4x32xf32>
    %47 = arith.mulf %44, %28 : vector<4x32xf32>
    %48 = arith.mulf %43, %45 : vector<4x32xf32>
    %49 = arith.addf %47, %48 : vector<4x32xf32>
    %50 = math.tanh %49 : vector<4x32xf32>
    %51 = arith.mulf %46, %50 : vector<4x32xf32>
    %52 = vector.extract_strided_slice %51 {offsets = [0, 0], sizes = [2, 32], strides = [1, 1]} : vector<4x32xf32> to vector<2x32xf32>
    %c0_20 = arith.constant 0 : index
    %c0_21 = arith.constant 0 : index
    %53 = vector.load %arg13[%c0_20, %c0_21] : memref<16x32xf32, #tpu.memory_space<vmem>>, vector<2x32xf32>
    tpu.vector_store %arg13[%c0_20, %c0_21], %52 {strides = array<i32>} : memref<16x32xf32, #tpu.memory_space<vmem>>, vector<2x32xf32>,
    %54 = vector.extract_strided_slice %51 {offsets = [2, 0], sizes = [2, 32], strides = [1, 1]} : vector<4x32xf32> to vector<2x32xf32>
    %c0_22 = arith.constant 0 : index
    %c0_23 = arith.constant 0 : index
    %55 = vector.load %arg14[%c0_22, %c0_23] : memref<16x32xf32, #tpu.memory_space<vmem>>, vector<2x32xf32>
    tpu.vector_store %arg14[%c0_22, %c0_23], %54 {strides = array<i32>} : memref<16x32xf32, #tpu.memory_space<vmem>>, vector<2x32xf32>,
    %56 = vector.extract_strided_slice %14 {offsets = [4, 0], sizes = [4, 128], strides = [1, 1]} : vector<32x128xf32> to vector<4x128xf32>
    %cst_24 = arith.constant dense<0.000000e+00> : vector<4x128xf32>
    %57 = tpu.matmul %51, %1, %cst_24 {dimension_numbers = #tpu.dot_dimension_numbers<[1], [0], [0], [1], [0, 0, 1, 1], [], []>} : vector<4x32xf32>, vector<32x128xf32>, vector<4x128xf32> -> vector<4x128xf32>
    %58 = arith.addf %57, %56 : vector<4x128xf32>
    %59 = vector.broadcast %23 : vector<1x128xf32> to vector<4x128xf32>
    %60 = arith.mulf %58, %59 : vector<4x128xf32>
    %61 = arith.negf %60 : vector<4x128xf32>
    %62 = math.exp %61 : vector<4x128xf32>
    %cst_25 = arith.constant 1.000000e+00 : f32
    %63 = vector.broadcast %cst_25 : f32 to vector<4x128xf32>
    %64 = arith.addf %63, %62 : vector<4x128xf32>
    %65 = arith.divf %63, %64 : vector<4x128xf32>
    %66 = vector.broadcast %23 : vector<1x128xf32> to vector<4x128xf32>
    %67 = arith.mulf %65, %66 : vector<4x128xf32>
    %68 = vector.broadcast %26 : vector<1x128xf32> to vector<4x128xf32>
    %69 = arith.addf %67, %68 : vector<4x128xf32>
    %70 = vector.extract_strided_slice %69 {offsets = [0, 0], sizes = [4, 32], strides = [1, 1]} : vector<4x128xf32> to vector<4x32xf32>
    %71 = vector.extract_strided_slice %69 {offsets = [0, 32], sizes = [4, 32], strides = [1, 1]} : vector<4x128xf32> to vector<4x32xf32>
    %72 = vector.extract_strided_slice %69 {offsets = [0, 64], sizes = [4, 32], strides = [1, 1]} : vector<4x128xf32> to vector<4x32xf32>
    %73 = vector.extract_strided_slice %69 {offsets = [0, 96], sizes = [4, 32], strides = [1, 1]} : vector<4x128xf32> to vector<4x32xf32>
    %74 = arith.mulf %71, %49 : vector<4x32xf32>
    %75 = arith.mulf %70, %72 : vector<4x32xf32>
    %76 = arith.addf %74, %75 : vector<4x32xf32>
    %77 = math.tanh %76 : vector<4x32xf32>
    %78 = arith.mulf %73, %77 : vector<4x32xf32>
    %79 = vector.extract_strided_slice %78 {offsets = [0, 0], sizes = [2, 32], strides = [1, 1]} : vector<4x32xf32> to vector<2x32xf32>
    %c2 = arith.constant 2 : index
    %c0_26 = arith.constant 0 : index
    %80 = vector.load %arg13[%c2, %c0_26] : memref<16x32xf32, #tpu.memory_space<vmem>>, vector<2x32xf32>
    tpu.vector_store %arg13[%c2, %c0_26], %79 {strides = array<i32>} : memref<16x32xf32, #tpu.memory_space<vmem>>, vector<2x32xf32>,
    %81 = vector.extract_strided_slice %78 {offsets = [2, 0], sizes = [2, 32], strides = [1, 1]} : vector<4x32xf32> to vector<2x32xf32>
    %c2_27 = arith.constant 2 : index
    %c0_28 = arith.constant 0 : index
    %82 = vector.load %arg14[%c2_27, %c0_28] : memref<16x32xf32, #tpu.memory_space<vmem>>, vector<2x32xf32>
    tpu.vector_store %arg14[%c2_27, %c0_28], %81 {strides = array<i32>} : memref<16x32xf32, #tpu.memory_space<vmem>>, vector<2x32xf32>,
    %83 = vector.extract_strided_slice %14 {offsets = [8, 0], sizes = [4, 128], strides = [1, 1]} : vector<32x128xf32> to vector<4x128xf32>
    %cst_29 = arith.constant dense<0.000000e+00> : vector<4x128xf32>
    %84 = tpu.matmul %78, %1, %cst_29 {dimension_numbers = #tpu.dot_dimension_numbers<[1], [0], [0], [1], [0, 0, 1, 1], [], []>} : vector<4x32xf32>, vector<32x128xf32>, vector<4x128xf32> -> vector<4x128xf32>
    %85 = arith.addf %84, %83 : vector<4x128xf32>
    %86 = vector.broadcast %23 : vector<1x128xf32> to vector<4x128xf32>
    %87 = arith.mulf %85, %86 : vector<4x128xf32>
    %88 = arith.negf %87 : vector<4x128xf32>
    %89 = math.exp %88 : vector<4x128xf32>
    %cst_30 = arith.constant 1.000000e+00 : f32
    %90 = vector.broadcast %cst_30 : f32 to vector<4x128xf32>
    %91 = arith.addf %90, %89 : vector<4x128xf32>
    %92 = arith.divf %90, %91 : vector<4x128xf32>
    %93 = vector.broadcast %23 : vector<1x128xf32> to vector<4x128xf32>
    %94 = arith.mulf %92, %93 : vector<4x128xf32>
    %95 = vector.broadcast %26 : vector<1x128xf32> to vector<4x128xf32>
    %96 = arith.addf %94, %95 : vector<4x128xf32>
    %97 = vector.extract_strided_slice %96 {offsets = [0, 0], sizes = [4, 32], strides = [1, 1]} : vector<4x128xf32> to vector<4x32xf32>
    %98 = vector.extract_strided_slice %96 {offsets = [0, 32], sizes = [4, 32], strides = [1, 1]} : vector<4x128xf32> to vector<4x32xf32>
    %99 = vector.extract_strided_slice %96 {offsets = [0, 64], sizes = [4, 32], strides = [1, 1]} : vector<4x128xf32> to vector<4x32xf32>
    %100 = vector.extract_strided_slice %96 {offsets = [0, 96], sizes = [4, 32], strides = [1, 1]} : vector<4x128xf32> to vector<4x32xf32>
    %101 = arith.mulf %98, %76 : vector<4x32xf32>
    %102 = arith.mulf %97, %99 : vector<4x32xf32>
    %103 = arith.addf %101, %102 : vector<4x32xf32>
    %104 = math.tanh %103 : vector<4x32xf32>
    %105 = arith.mulf %100, %104 : vector<4x32xf32>
    %106 = vector.extract_strided_slice %105 {offsets = [0, 0], sizes = [2, 32], strides = [1, 1]} : vector<4x32xf32> to vector<2x32xf32>
    %c4 = arith.constant 4 : index
    %c0_31 = arith.constant 0 : index
    %107 = vector.load %arg13[%c4, %c0_31] : memref<16x32xf32, #tpu.memory_space<vmem>>, vector<2x32xf32>
    tpu.vector_store %arg13[%c4, %c0_31], %106 {strides = array<i32>} : memref<16x32xf32, #tpu.memory_space<vmem>>, vector<2x32xf32>,
    %108 = vector.extract_strided_slice %105 {offsets = [2, 0], sizes = [2, 32], strides = [1, 1]} : vector<4x32xf32> to vector<2x32xf32>
    %c4_32 = arith.constant 4 : index
    %c0_33 = arith.constant 0 : index
    %109 = vector.load %arg14[%c4_32, %c0_33] : memref<16x32xf32, #tpu.memory_space<vmem>>, vector<2x32xf32>
    tpu.vector_store %arg14[%c4_32, %c0_33], %108 {strides = array<i32>} : memref<16x32xf32, #tpu.memory_space<vmem>>, vector<2x32xf32>,
    %110 = vector.extract_strided_slice %14 {offsets = [12, 0], sizes = [4, 128], strides = [1, 1]} : vector<32x128xf32> to vector<4x128xf32>
    %cst_34 = arith.constant dense<0.000000e+00> : vector<4x128xf32>
    %111 = tpu.matmul %105, %1, %cst_34 {dimension_numbers = #tpu.dot_dimension_numbers<[1], [0], [0], [1], [0, 0, 1, 1], [], []>} : vector<4x32xf32>, vector<32x128xf32>, vector<4x128xf32> -> vector<4x128xf32>
    %112 = arith.addf %111, %110 : vector<4x128xf32>
    %113 = vector.broadcast %23 : vector<1x128xf32> to vector<4x128xf32>
    %114 = arith.mulf %112, %113 : vector<4x128xf32>
    %115 = arith.negf %114 : vector<4x128xf32>
    %116 = math.exp %115 : vector<4x128xf32>
    %cst_35 = arith.constant 1.000000e+00 : f32
    %117 = vector.broadcast %cst_35 : f32 to vector<4x128xf32>
    %118 = arith.addf %117, %116 : vector<4x128xf32>
    %119 = arith.divf %117, %118 : vector<4x128xf32>
    %120 = vector.broadcast %23 : vector<1x128xf32> to vector<4x128xf32>
    %121 = arith.mulf %119, %120 : vector<4x128xf32>
    %122 = vector.broadcast %26 : vector<1x128xf32> to vector<4x128xf32>
    %123 = arith.addf %121, %122 : vector<4x128xf32>
    %124 = vector.extract_strided_slice %123 {offsets = [0, 0], sizes = [4, 32], strides = [1, 1]} : vector<4x128xf32> to vector<4x32xf32>
    %125 = vector.extract_strided_slice %123 {offsets = [0, 32], sizes = [4, 32], strides = [1, 1]} : vector<4x128xf32> to vector<4x32xf32>
    %126 = vector.extract_strided_slice %123 {offsets = [0, 64], sizes = [4, 32], strides = [1, 1]} : vector<4x128xf32> to vector<4x32xf32>
    %127 = vector.extract_strided_slice %123 {offsets = [0, 96], sizes = [4, 32], strides = [1, 1]} : vector<4x128xf32> to vector<4x32xf32>
    %128 = arith.mulf %125, %103 : vector<4x32xf32>
    %129 = arith.mulf %124, %126 : vector<4x32xf32>
    %130 = arith.addf %128, %129 : vector<4x32xf32>
    %131 = math.tanh %130 : vector<4x32xf32>
    %132 = arith.mulf %127, %131 : vector<4x32xf32>
    %133 = vector.extract_strided_slice %132 {offsets = [0, 0], sizes = [2, 32], strides = [1, 1]} : vector<4x32xf32> to vector<2x32xf32>
    %c6 = arith.constant 6 : index
    %c0_36 = arith.constant 0 : index
    %134 = vector.load %arg13[%c6, %c0_36] : memref<16x32xf32, #tpu.memory_space<vmem>>, vector<2x32xf32>
    tpu.vector_store %arg13[%c6, %c0_36], %133 {strides = array<i32>} : memref<16x32xf32, #tpu.memory_space<vmem>>, vector<2x32xf32>,
    %135 = vector.extract_strided_slice %132 {offsets = [2, 0], sizes = [2, 32], strides = [1, 1]} : vector<4x32xf32> to vector<2x32xf32>
    %c6_37 = arith.constant 6 : index
    %c0_38 = arith.constant 0 : index
    %136 = vector.load %arg14[%c6_37, %c0_38] : memref<16x32xf32, #tpu.memory_space<vmem>>, vector<2x32xf32>
    tpu.vector_store %arg14[%c6_37, %c0_38], %135 {strides = array<i32>} : memref<16x32xf32, #tpu.memory_space<vmem>>, vector<2x32xf32>,
    %137 = vector.extract_strided_slice %14 {offsets = [16, 0], sizes = [4, 128], strides = [1, 1]} : vector<32x128xf32> to vector<4x128xf32>
    %cst_39 = arith.constant dense<0.000000e+00> : vector<4x128xf32>
    %138 = tpu.matmul %132, %1, %cst_39 {dimension_numbers = #tpu.dot_dimension_numbers<[1], [0], [0], [1], [0, 0, 1, 1], [], []>} : vector<4x32xf32>, vector<32x128xf32>, vector<4x128xf32> -> vector<4x128xf32>
    %139 = arith.addf %138, %137 : vector<4x128xf32>
    %140 = vector.broadcast %23 : vector<1x128xf32> to vector<4x128xf32>
    %141 = arith.mulf %139, %140 : vector<4x128xf32>
    %142 = arith.negf %141 : vector<4x128xf32>
    %143 = math.exp %142 : vector<4x128xf32>
    %cst_40 = arith.constant 1.000000e+00 : f32
    %144 = vector.broadcast %cst_40 : f32 to vector<4x128xf32>
    %145 = arith.addf %144, %143 : vector<4x128xf32>
    %146 = arith.divf %144, %145 : vector<4x128xf32>
    %147 = vector.broadcast %23 : vector<1x128xf32> to vector<4x128xf32>
    %148 = arith.mulf %146, %147 : vector<4x128xf32>
    %149 = vector.broadcast %26 : vector<1x128xf32> to vector<4x128xf32>
    %150 = arith.addf %148, %149 : vector<4x128xf32>
    %151 = vector.extract_strided_slice %150 {offsets = [0, 0], sizes = [4, 32], strides = [1, 1]} : vector<4x128xf32> to vector<4x32xf32>
    %152 = vector.extract_strided_slice %150 {offsets = [0, 32], sizes = [4, 32], strides = [1, 1]} : vector<4x128xf32> to vector<4x32xf32>
    %153 = vector.extract_strided_slice %150 {offsets = [0, 64], sizes = [4, 32], strides = [1, 1]} : vector<4x128xf32> to vector<4x32xf32>
    %154 = vector.extract_strided_slice %150 {offsets = [0, 96], sizes = [4, 32], strides = [1, 1]} : vector<4x128xf32> to vector<4x32xf32>
    %155 = arith.mulf %152, %130 : vector<4x32xf32>
    %156 = arith.mulf %151, %153 : vector<4x32xf32>
    %157 = arith.addf %155, %156 : vector<4x32xf32>
    %158 = math.tanh %157 : vector<4x32xf32>
    %159 = arith.mulf %154, %158 : vector<4x32xf32>
    %160 = vector.extract_strided_slice %159 {offsets = [0, 0], sizes = [2, 32], strides = [1, 1]} : vector<4x32xf32> to vector<2x32xf32>
    %c8 = arith.constant 8 : index
    %c0_41 = arith.constant 0 : index
    %161 = vector.load %arg13[%c8, %c0_41] : memref<16x32xf32, #tpu.memory_space<vmem>>, vector<2x32xf32>
    tpu.vector_store %arg13[%c8, %c0_41], %160 {strides = array<i32>} : memref<16x32xf32, #tpu.memory_space<vmem>>, vector<2x32xf32>,
    %162 = vector.extract_strided_slice %159 {offsets = [2, 0], sizes = [2, 32], strides = [1, 1]} : vector<4x32xf32> to vector<2x32xf32>
    %c8_42 = arith.constant 8 : index
    %c0_43 = arith.constant 0 : index
    %163 = vector.load %arg14[%c8_42, %c0_43] : memref<16x32xf32, #tpu.memory_space<vmem>>, vector<2x32xf32>
    tpu.vector_store %arg14[%c8_42, %c0_43], %162 {strides = array<i32>} : memref<16x32xf32, #tpu.memory_space<vmem>>, vector<2x32xf32>,
    %164 = vector.extract_strided_slice %14 {offsets = [20, 0], sizes = [4, 128], strides = [1, 1]} : vector<32x128xf32> to vector<4x128xf32>
    %cst_44 = arith.constant dense<0.000000e+00> : vector<4x128xf32>
    %165 = tpu.matmul %159, %1, %cst_44 {dimension_numbers = #tpu.dot_dimension_numbers<[1], [0], [0], [1], [0, 0, 1, 1], [], []>} : vector<4x32xf32>, vector<32x128xf32>, vector<4x128xf32> -> vector<4x128xf32>
    %166 = arith.addf %165, %164 : vector<4x128xf32>
    %167 = vector.broadcast %23 : vector<1x128xf32> to vector<4x128xf32>
    %168 = arith.mulf %166, %167 : vector<4x128xf32>
    %169 = arith.negf %168 : vector<4x128xf32>
    %170 = math.exp %169 : vector<4x128xf32>
    %cst_45 = arith.constant 1.000000e+00 : f32
    %171 = vector.broadcast %cst_45 : f32 to vector<4x128xf32>
    %172 = arith.addf %171, %170 : vector<4x128xf32>
    %173 = arith.divf %171, %172 : vector<4x128xf32>
    %174 = vector.broadcast %23 : vector<1x128xf32> to vector<4x128xf32>
    %175 = arith.mulf %173, %174 : vector<4x128xf32>
    %176 = vector.broadcast %26 : vector<1x128xf32> to vector<4x128xf32>
    %177 = arith.addf %175, %176 : vector<4x128xf32>
    %178 = vector.extract_strided_slice %177 {offsets = [0, 0], sizes = [4, 32], strides = [1, 1]} : vector<4x128xf32> to vector<4x32xf32>
    %179 = vector.extract_strided_slice %177 {offsets = [0, 32], sizes = [4, 32], strides = [1, 1]} : vector<4x128xf32> to vector<4x32xf32>
    %180 = vector.extract_strided_slice %177 {offsets = [0, 64], sizes = [4, 32], strides = [1, 1]} : vector<4x128xf32> to vector<4x32xf32>
    %181 = vector.extract_strided_slice %177 {offsets = [0, 96], sizes = [4, 32], strides = [1, 1]} : vector<4x128xf32> to vector<4x32xf32>
    %182 = arith.mulf %179, %157 : vector<4x32xf32>
    %183 = arith.mulf %178, %180 : vector<4x32xf32>
    %184 = arith.addf %182, %183 : vector<4x32xf32>
    %185 = math.tanh %184 : vector<4x32xf32>
    %186 = arith.mulf %181, %185 : vector<4x32xf32>
    %187 = vector.extract_strided_slice %186 {offsets = [0, 0], sizes = [2, 32], strides = [1, 1]} : vector<4x32xf32> to vector<2x32xf32>
    %c10 = arith.constant 10 : index
    %c0_46 = arith.constant 0 : index
    %188 = vector.load %arg13[%c10, %c0_46] : memref<16x32xf32, #tpu.memory_space<vmem>>, vector<2x32xf32>
    tpu.vector_store %arg13[%c10, %c0_46], %187 {strides = array<i32>} : memref<16x32xf32, #tpu.memory_space<vmem>>, vector<2x32xf32>,
    %189 = vector.extract_strided_slice %186 {offsets = [2, 0], sizes = [2, 32], strides = [1, 1]} : vector<4x32xf32> to vector<2x32xf32>
    %c10_47 = arith.constant 10 : index
    %c0_48 = arith.constant 0 : index
    %190 = vector.load %arg14[%c10_47, %c0_48] : memref<16x32xf32, #tpu.memory_space<vmem>>, vector<2x32xf32>
    tpu.vector_store %arg14[%c10_47, %c0_48], %189 {strides = array<i32>} : memref<16x32xf32, #tpu.memory_space<vmem>>, vector<2x32xf32>,
    %191 = vector.extract_strided_slice %14 {offsets = [24, 0], sizes = [4, 128], strides = [1, 1]} : vector<32x128xf32> to vector<4x128xf32>
    %cst_49 = arith.constant dense<0.000000e+00> : vector<4x128xf32>
    %192 = tpu.matmul %186, %1, %cst_49 {dimension_numbers = #tpu.dot_dimension_numbers<[1], [0], [0], [1], [0, 0, 1, 1], [], []>} : vector<4x32xf32>, vector<32x128xf32>, vector<4x128xf32> -> vector<4x128xf32>
    %193 = arith.addf %192, %191 : vector<4x128xf32>
    %194 = vector.broadcast %23 : vector<1x128xf32> to vector<4x128xf32>
    %195 = arith.mulf %193, %194 : vector<4x128xf32>
    %196 = arith.negf %195 : vector<4x128xf32>
    %197 = math.exp %196 : vector<4x128xf32>
    %cst_50 = arith.constant 1.000000e+00 : f32
    %198 = vector.broadcast %cst_50 : f32 to vector<4x128xf32>
    %199 = arith.addf %198, %197 : vector<4x128xf32>
    %200 = arith.divf %198, %199 : vector<4x128xf32>
    %201 = vector.broadcast %23 : vector<1x128xf32> to vector<4x128xf32>
    %202 = arith.mulf %200, %201 : vector<4x128xf32>
    %203 = vector.broadcast %26 : vector<1x128xf32> to vector<4x128xf32>
    %204 = arith.addf %202, %203 : vector<4x128xf32>
    %205 = vector.extract_strided_slice %204 {offsets = [0, 0], sizes = [4, 32], strides = [1, 1]} : vector<4x128xf32> to vector<4x32xf32>
    %206 = vector.extract_strided_slice %204 {offsets = [0, 32], sizes = [4, 32], strides = [1, 1]} : vector<4x128xf32> to vector<4x32xf32>
    %207 = vector.extract_strided_slice %204 {offsets = [0, 64], sizes = [4, 32], strides = [1, 1]} : vector<4x128xf32> to vector<4x32xf32>
    %208 = vector.extract_strided_slice %204 {offsets = [0, 96], sizes = [4, 32], strides = [1, 1]} : vector<4x128xf32> to vector<4x32xf32>
    %209 = arith.mulf %206, %184 : vector<4x32xf32>
    %210 = arith.mulf %205, %207 : vector<4x32xf32>
    %211 = arith.addf %209, %210 : vector<4x32xf32>
    %212 = math.tanh %211 : vector<4x32xf32>
    %213 = arith.mulf %208, %212 : vector<4x32xf32>
    %214 = vector.extract_strided_slice %213 {offsets = [0, 0], sizes = [2, 32], strides = [1, 1]} : vector<4x32xf32> to vector<2x32xf32>
    %c12 = arith.constant 12 : index
    %c0_51 = arith.constant 0 : index
    %215 = vector.load %arg13[%c12, %c0_51] : memref<16x32xf32, #tpu.memory_space<vmem>>, vector<2x32xf32>
    tpu.vector_store %arg13[%c12, %c0_51], %214 {strides = array<i32>} : memref<16x32xf32, #tpu.memory_space<vmem>>, vector<2x32xf32>,
    %216 = vector.extract_strided_slice %213 {offsets = [2, 0], sizes = [2, 32], strides = [1, 1]} : vector<4x32xf32> to vector<2x32xf32>
    %c12_52 = arith.constant 12 : index
    %c0_53 = arith.constant 0 : index
    %217 = vector.load %arg14[%c12_52, %c0_53] : memref<16x32xf32, #tpu.memory_space<vmem>>, vector<2x32xf32>
    tpu.vector_store %arg14[%c12_52, %c0_53], %216 {strides = array<i32>} : memref<16x32xf32, #tpu.memory_space<vmem>>, vector<2x32xf32>,
    %218 = vector.extract_strided_slice %14 {offsets = [28, 0], sizes = [4, 128], strides = [1, 1]} : vector<32x128xf32> to vector<4x128xf32>
    %cst_54 = arith.constant dense<0.000000e+00> : vector<4x128xf32>
    %219 = tpu.matmul %213, %1, %cst_54 {dimension_numbers = #tpu.dot_dimension_numbers<[1], [0], [0], [1], [0, 0, 1, 1], [], []>} : vector<4x32xf32>, vector<32x128xf32>, vector<4x128xf32> -> vector<4x128xf32>
    %220 = arith.addf %219, %218 : vector<4x128xf32>
    %221 = vector.broadcast %23 : vector<1x128xf32> to vector<4x128xf32>
    %222 = arith.mulf %220, %221 : vector<4x128xf32>
    %223 = arith.negf %222 : vector<4x128xf32>
    %224 = math.exp %223 : vector<4x128xf32>
    %cst_55 = arith.constant 1.000000e+00 : f32
    %225 = vector.broadcast %cst_55 : f32 to vector<4x128xf32>
    %226 = arith.addf %225, %224 : vector<4x128xf32>
    %227 = arith.divf %225, %226 : vector<4x128xf32>
    %228 = vector.broadcast %23 : vector<1x128xf32> to vector<4x128xf32>
    %229 = arith.mulf %227, %228 : vector<4x128xf32>
    %230 = vector.broadcast %26 : vector<1x128xf32> to vector<4x128xf32>
    %231 = arith.addf %229, %230 : vector<4x128xf32>
    %232 = vector.extract_strided_slice %231 {offsets = [0, 0], sizes = [4, 32], strides = [1, 1]} : vector<4x128xf32> to vector<4x32xf32>
    %233 = vector.extract_strided_slice %231 {offsets = [0, 32], sizes = [4, 32], strides = [1, 1]} : vector<4x128xf32> to vector<4x32xf32>
    %234 = vector.extract_strided_slice %231 {offsets = [0, 64], sizes = [4, 32], strides = [1, 1]} : vector<4x128xf32> to vector<4x32xf32>
    %235 = vector.extract_strided_slice %231 {offsets = [0, 96], sizes = [4, 32], strides = [1, 1]} : vector<4x128xf32> to vector<4x32xf32>
    %236 = arith.mulf %233, %211 : vector<4x32xf32>
    %237 = arith.mulf %232, %234 : vector<4x32xf32>
    %238 = arith.addf %236, %237 : vector<4x32xf32>
    %239 = math.tanh %238 : vector<4x32xf32>
    %240 = arith.mulf %235, %239 : vector<4x32xf32>
    %241 = vector.extract_strided_slice %240 {offsets = [0, 0], sizes = [2, 32], strides = [1, 1]} : vector<4x32xf32> to vector<2x32xf32>
    %c14 = arith.constant 14 : index
    %c0_56 = arith.constant 0 : index
    %242 = vector.load %arg13[%c14, %c0_56] : memref<16x32xf32, #tpu.memory_space<vmem>>, vector<2x32xf32>
    tpu.vector_store %arg13[%c14, %c0_56], %241 {strides = array<i32>} : memref<16x32xf32, #tpu.memory_space<vmem>>, vector<2x32xf32>,
    %243 = vector.extract_strided_slice %240 {offsets = [2, 0], sizes = [2, 32], strides = [1, 1]} : vector<4x32xf32> to vector<2x32xf32>
    %c14_57 = arith.constant 14 : index
    %c0_58 = arith.constant 0 : index
    %244 = vector.load %arg14[%c14_57, %c0_58] : memref<16x32xf32, #tpu.memory_space<vmem>>, vector<2x32xf32>
    tpu.vector_store %arg14[%c14_57, %c0_58], %243 {strides = array<i32>} : memref<16x32xf32, #tpu.memory_space<vmem>>, vector<2x32xf32>,
    %c0_59 = arith.constant 0 : index
    %c0_60 = arith.constant 0 : index
    %245 = vector.load %arg6[%c0_59, %c0_60] : memref<32x32xf32, #tpu.memory_space<vmem>>, vector<32x32xf32>
    %cst_61 = arith.constant dense<0.000000e+00> : vector<20x32xf32>
    %246 = tpu.matmul %0, %245, %cst_61 {dimension_numbers = #tpu.dot_dimension_numbers<[1], [0], [0], [1], [0, 0, 1, 1], [], []>} : vector<20x32xf32>, vector<32x32xf32>, vector<20x32xf32> -> vector<20x32xf32>
    %247 = tpu.iota {dimensions = array<i32: 1>} : vector<16x20xi32>
    %c0_62 = arith.constant 0 : index
    %c0_63 = arith.constant 0 : index
    %248 = vector.load %arg0[%c0_62, %c0_63] : memref<16x1xi32, #tpu.memory_space<vmem>>, vector<16x1xi32>
    %249 = vector.broadcast %248 : vector<16x1xi32> to vector<16x20xi32>
    %250 = arith.cmpi eq, %249, %247 : vector<16x20xi32>
    %cst_64 = arith.constant 1.000000e+00 : f32
    %cst_65 = arith.constant 0.000000e+00 : f32
    %251 = vector.broadcast %cst_64 : f32 to vector<16x20xf32>
    %252 = vector.broadcast %cst_65 : f32 to vector<16x20xf32>
    %253 = arith.select %250, %251, %252 : vector<16x20xi1>, vector<16x20xf32>
    %cst_66 = arith.constant dense<0.000000e+00> : vector<16x32xf32>
    %254 = tpu.matmul %253, %246, %cst_66 {dimension_numbers = #tpu.dot_dimension_numbers<[1], [0], [0], [1], [0, 0, 1, 1], [], []>} : vector<16x20xf32>, vector<20x32xf32>, vector<16x32xf32> -> vector<16x32xf32>
    %c0_67 = arith.constant 0 : index
    %c0_68 = arith.constant 0 : index
    %255 = vector.load %arg9[%c0_67, %c0_68] : memref<1x32xf32, #tpu.memory_space<vmem>>, vector<1x32xf32>
    %256 = vector.broadcast %255 : vector<1x32xf32> to vector<16x32xf32>
    %257 = arith.addf %254, %256 : vector<16x32xf32>
    %c0_69 = arith.constant 0 : index
    %c0_70 = arith.constant 0 : index
    %258 = vector.load %arg13[%c0_69, %c0_70] : memref<16x32xf32, #tpu.memory_space<vmem>>, vector<16x32xf32>
    %c0_71 = arith.constant 0 : index
    %c0_72 = arith.constant 0 : index
    %259 = vector.load %arg7[%c0_71, %c0_72] : memref<32x32xf32, #tpu.memory_space<vmem>>, vector<32x32xf32>
    %cst_73 = arith.constant dense<0.000000e+00> : vector<16x32xf32>
    %260 = tpu.matmul %258, %259, %cst_73 {dimension_numbers = #tpu.dot_dimension_numbers<[1], [0], [0], [1], [0, 0, 1, 1], [], []>} : vector<16x32xf32>, vector<32x32xf32>, vector<16x32xf32> -> vector<16x32xf32>
    %c0_74 = arith.constant 0 : index
    %c0_75 = arith.constant 0 : index
    %261 = vector.load %arg14[%c0_74, %c0_75] : memref<16x32xf32, #tpu.memory_space<vmem>>, vector<16x32xf32>
    %c0_76 = arith.constant 0 : index
    %c0_77 = arith.constant 0 : index
    %262 = vector.load %arg8[%c0_76, %c0_77] : memref<32x32xf32, #tpu.memory_space<vmem>>, vector<32x32xf32>
    %cst_78 = arith.constant dense<0.000000e+00> : vector<16x32xf32>
    %263 = tpu.matmul %261, %262, %cst_78 {dimension_numbers = #tpu.dot_dimension_numbers<[1], [0], [0], [1], [0, 0, 1, 1], [], []>} : vector<16x32xf32>, vector<32x32xf32>, vector<16x32xf32> -> vector<16x32xf32>
    %264 = arith.addf %257, %260 : vector<16x32xf32>
    %265 = arith.addf %264, %263 : vector<16x32xf32>
    %266 = math.tanh %265 : vector<16x32xf32>
    %267 = vector.extract_strided_slice %266 {offsets = [0, 0], sizes = [2, 32], strides = [1, 1]} : vector<16x32xf32> to vector<2x32xf32>
    %268 = vector.extract_strided_slice %266 {offsets = [2, 0], sizes = [2, 32], strides = [1, 1]} : vector<16x32xf32> to vector<2x32xf32>
    %269 = arith.maximumf %267, %268 : vector<2x32xf32>
    %270 = vector.extract_strided_slice %266 {offsets = [4, 0], sizes = [2, 32], strides = [1, 1]} : vector<16x32xf32> to vector<2x32xf32>
    %271 = arith.maximumf %269, %270 : vector<2x32xf32>
    %272 = vector.extract_strided_slice %266 {offsets = [6, 0], sizes = [2, 32], strides = [1, 1]} : vector<16x32xf32> to vector<2x32xf32>
    %273 = arith.maximumf %271, %272 : vector<2x32xf32>
    %274 = vector.extract_strided_slice %266 {offsets = [8, 0], sizes = [2, 32], strides = [1, 1]} : vector<16x32xf32> to vector<2x32xf32>
    %275 = arith.maximumf %273, %274 : vector<2x32xf32>
    %276 = vector.extract_strided_slice %266 {offsets = [10, 0], sizes = [2, 32], strides = [1, 1]} : vector<16x32xf32> to vector<2x32xf32>
    %277 = arith.maximumf %275, %276 : vector<2x32xf32>
    %278 = vector.extract_strided_slice %266 {offsets = [12, 0], sizes = [2, 32], strides = [1, 1]} : vector<16x32xf32> to vector<2x32xf32>
    %279 = arith.maximumf %277, %278 : vector<2x32xf32>
    %280 = vector.extract_strided_slice %266 {offsets = [14, 0], sizes = [2, 32], strides = [1, 1]} : vector<16x32xf32> to vector<2x32xf32>
    %281 = arith.maximumf %279, %280 : vector<2x32xf32>
    %c0_79 = arith.constant 0 : index
    %c0_80 = arith.constant 0 : index
    %282 = vector.load %arg10[%c0_79, %c0_80] : memref<1x32xf32, #tpu.memory_space<vmem>>, vector<1x32xf32>
    %283 = vector.broadcast %282 : vector<1x32xf32> to vector<2x32xf32>
    %284 = arith.mulf %281, %283 : vector<2x32xf32>
    %cst_81 = arith.constant dense<0.000000e+00> : vector<2xf32>
    %285 = vector.multi_reduction <add>, %284, %cst_81 [1] : vector<2x32xf32> to vector<2xf32>
    %286 = vector.shape_cast %285 : vector<2xf32> to vector<2x1xf32>
    %c0_82 = arith.constant 0 : index
    %c0_83 = arith.constant 0 : index
    %287 = memref.load %arg11[%c0_82, %c0_83] : memref<1x1xf32, #tpu.memory_space<smem>>
    %288 = vector.broadcast %287 : f32 to vector<2x1xf32>
    %289 = arith.addf %286, %288 : vector<2x1xf32>
    %290 = arith.negf %289 : vector<2x1xf32>
    %291 = math.exp %290 : vector<2x1xf32>
    %cst_84 = arith.constant 1.000000e+00 : f32
    %292 = vector.broadcast %cst_84 : f32 to vector<2x1xf32>
    %293 = arith.addf %292, %291 : vector<2x1xf32>
    %294 = arith.divf %292, %293 : vector<2x1xf32>
    %c0_85 = arith.constant 0 : index
    %c0_86 = arith.constant 0 : index
    %295 = vector.load %arg12[%c0_85, %c0_86] : memref<2x1xf32, #tpu.memory_space<vmem>>, vector<2x1xf32>
    tpu.vector_store %arg12[%c0_85, %c0_86], %294 {strides = array<i32>} : memref<2x1xf32, #tpu.memory_space<vmem>>, vector<2x1xf32>,
    return
  }
}

</mosaic_0001>

<llo_original>
// kernel: tpu_custom_call.1
$region0: #{tpu_custom_call.1}
  #allocation0 [shape = 'u32[]', space=smem, size = 0x4, offset = 0x4, fixed_abs, tag = 'smem constant byte address 0x4 - core index']
  #allocation1 [shape = 'u32[144,128]{1,0:T(1,128)}', space=vmem, size = 0x12000, scoped, tag = 'internal scratch']
  #allocation2 [shape = 'f32[16,32]{1,0:T(8,128)}', space=vmem, size = 0x2000, scoped, tag = 'scratch operand']
  #allocation3 [shape = 'f32[16,32]{1,0:T(8,128)}', space=vmem, size = 0x2000, scoped, tag = 'scratch operand']
  #allocation4 [shape = 'f32[1,1]{1,0:T(1,128)S(6)}', space=smem, size = 0x200, scoped, tag = 'scoped memory for tpu_custom_call.1']
  %s0 = inlined_call_operand.vmem [shape: s32[16,1], index: 0, kind: input, shape index: {}]
  %s1 = inlined_call_operand.vmem [shape: s32[32,1], index: 1, kind: input, shape index: {}]
  %s2 = inlined_call_operand.hbm [shape: f32[20,32], index: 2, kind: input, shape index: {}]
  %s3 = inlined_call_operand.vmem [shape: f32[32,128], index: 3, kind: input, shape index: {}]
  %s4 = inlined_call_operand.vmem [shape: f32[32,128], index: 4, kind: input, shape index: {}]
  %s5 = inlined_call_operand.vmem [shape: f32[1,128], index: 5, kind: input, shape index: {}]
  %s6 = inlined_call_operand.hbm [shape: f32[32,32], index: 6, kind: input, shape index: {}]
  %s7 = inlined_call_operand.hbm [shape: f32[32,32], index: 7, kind: input, shape index: {}]
  %s8 = inlined_call_operand.hbm [shape: f32[32,32], index: 8, kind: input, shape index: {}]
  %s9 = inlined_call_operand.vmem [shape: f32[1,32], index: 9, kind: input, shape index: {}]
  %s10 = inlined_call_operand.vmem [shape: f32[1,32], index: 10, kind: input, shape index: {}]
  %s11 = inlined_call_operand.<no memory space> [shape: f32[1,1], index: 11, kind: input, shape index: {}]
  %s12 = inlined_call_operand.vmem [shape: f32[2,1], index: 12, kind: output, shape index: {}]
  %s13 = sld [smem:[#allocation0]]
  $region74: #{tpu_custom_call.1} parent=0
    _
  %s15 = ssub.s32 1, %s13
  %s16 = scalar_select 0, %s15, %s13
  %17 = sst [smem:[#allocation4]] %s11
  $region1: #{tpu_custom_call.1} parent=0
    #allocation5 [shape = 'u8[12288]{0}', space=vmem, size = 0x3000, scoped, tag = 'input window, operand 2, single buffered']
    #allocation6 [shape = 's32[1]{0}', space=sflag, size = 0x4, scoped, tag = 'scoped memory for tpu_custom_call.1']
    #allocation7 [shape = 'u8[16384]{0}', space=vmem, size = 0x4000, scoped, tag = 'input window, operand 6, single buffered']
    #allocation8 [shape = 's32[1]{0}', space=sflag, size = 0x4, scoped, tag = 'scoped memory for tpu_custom_call.1']
    #allocation9 [shape = 'u8[16384]{0}', space=vmem, size = 0x4000, scoped, tag = 'input window, operand 7, single buffered']
    #allocation10 [shape = 'u8[16384]{0}', space=vmem, size = 0x4000, scoped, tag = 'input window, operand 8, single buffered']
    #allocation11 [shape = 's32[1]{0}', space=sflag, size = 0x4, scoped, tag = 'scoped memory for tpu_custom_call.1']
    %18 = vsyncpa [#allocation6], 0
    %19 = vsyncpa [#allocation8], 0
    %20 = vsyncpa [#allocation11], 0
    // Predicated region
    $region2: #{tpu_custom_call.1} parent=1 // pred_check
      _
    $region3: #{tpu_custom_call.1} parent=1 // pred_check_branch
      %22 = sbr.rel (0) target = $region5
    $region4: #{tpu_custom_call.1} parent=1 // pred_region
      _
    $region5: #{tpu_custom_call.1} parent=1 // pred_fallthru
      _
    // Predicated region
    $region6: #{tpu_custom_call.1} parent=1 // pred_check
      _
    $region7: #{tpu_custom_call.1} parent=1 // pred_check_branch
      %24 = sbr.rel (0) target = $region9
    $region8: #{tpu_custom_call.1} parent=1 // pred_region
      _
    $region9: #{tpu_custom_call.1} parent=1 // pred_fallthru
      _
    // Predicated region
    $region10: #{tpu_custom_call.1} parent=1 // pred_check
      _
    $region11: #{tpu_custom_call.1} parent=1 // pred_check_branch
      %26 = sbr.rel (0) target = $region13
    $region12: #{tpu_custom_call.1} parent=1 // pred_region
      %s28 = ssub.s32 384, 384
      %29 = vsyncadd [#allocation6], %s28
      %s30 = sshll.u32 [#allocation5], 4
      %s31 = int_to_ptr.vmem [resolvable:$true] %s30
      %36 = dma.hbm_to_vmem [thread:$0]  %s2, 384, %s31, [#allocation6], 128, 128, 8
    $region13: #{tpu_custom_call.1} parent=1 // pred_fallthru
      _
    // Predicated region
    $region14: #{tpu_custom_call.1} parent=1 // pred_check
      _
    $region15: #{tpu_custom_call.1} parent=1 // pred_check_branch
      %38 = sbr.rel (0) target = $region17
    $region16: #{tpu_custom_call.1} parent=1 // pred_region
      _
    $region17: #{tpu_custom_call.1} parent=1 // pred_fallthru
      _
    // Predicated region
    $region18: #{tpu_custom_call.1} parent=1 // pred_check
      _
    $region19: #{tpu_custom_call.1} parent=1 // pred_check_branch
      %40 = sbr.rel (0) target = $region21
    $region20: #{tpu_custom_call.1} parent=1 // pred_region
      _
    $region21: #{tpu_custom_call.1} parent=1 // pred_fallthru
      _
    // Predicated region
    $region22: #{tpu_custom_call.1} parent=1 // pred_check
      _
    $region23: #{tpu_custom_call.1} parent=1 // pred_check_branch
      %42 = sbr.rel (0) target = $region25
    $region24: #{tpu_custom_call.1} parent=1 // pred_region
      _
    $region25: #{tpu_custom_call.1} parent=1 // pred_fallthru
      _
    // Predicated region
    $region26: #{tpu_custom_call.1} parent=1 // pred_check
      _
    $region27: #{tpu_custom_call.1} parent=1 // pred_check_branch
      %44 = sbr.rel (0) target = $region29
    $region28: #{tpu_custom_call.1} parent=1 // pred_region
      %s46 = ssub.s32 512, 512
      %47 = vsyncadd [#allocation8], %s46
      %s48 = sshll.u32 [#allocation7], 4
      %s49 = int_to_ptr.vmem [resolvable:$true] %s48
      %54 = dma.hbm_to_vmem [thread:$0]  %s6, 512, %s49, [#allocation8], 128, 128, 8
    $region29: #{tpu_custom_call.1} parent=1 // pred_fallthru
      _
    // Predicated region
    $region30: #{tpu_custom_call.1} parent=1 // pred_check
      _
    $region31: #{tpu_custom_call.1} parent=1 // pred_check_branch
      %56 = sbr.rel (0) target = $region33
    $region32: #{tpu_custom_call.1} parent=1 // pred_region
      %s58 = ssub.s32 512, 512
      %59 = vsyncadd [#allocation8], %s58
      %s60 = sshll.u32 [#allocation9], 4
      %s61 = int_to_ptr.vmem [resolvable:$true] %s60
      %66 = dma.hbm_to_vmem [thread:$0]  %s7, 512, %s61, [#allocation8], 128, 128, 8
    $region33: #{tpu_custom_call.1} parent=1 // pred_fallthru
      _
    // Predicated region
    $region34: #{tpu_custom_call.1} parent=1 // pred_check
      _
    $region35: #{tpu_custom_call.1} parent=1 // pred_check_branch
      %68 = sbr.rel (0) target = $region37
    $region36: #{tpu_custom_call.1} parent=1 // pred_region
      %s70 = ssub.s32 512, 512
      %71 = vsyncadd [#allocation11], %s70
      %s72 = sshll.u32 [#allocation10], 4
      %s73 = int_to_ptr.vmem [resolvable:$true] %s72
      %78 = dma.hbm_to_vmem [thread:$0]  %s8, 512, %s73, [#allocation11], 128, 128, 8
    $region37: #{tpu_custom_call.1} parent=1 // pred_fallthru
      _
    // Predicated region
    $region38: #{tpu_custom_call.1} parent=1 // pred_check
      _
    $region39: #{tpu_custom_call.1} parent=1 // pred_check_branch
      %80 = sbr.rel (0) target = $region41
    $region40: #{tpu_custom_call.1} parent=1 // pred_region
      _
    $region41: #{tpu_custom_call.1} parent=1 // pred_fallthru
      _
    // Predicated region
    $region42: #{tpu_custom_call.1} parent=1 // pred_check
      _
    $region43: #{tpu_custom_call.1} parent=1 // pred_check_branch
      %82 = sbr.rel (0) target = $region45
    $region44: #{tpu_custom_call.1} parent=1 // pred_region
      _
    $region45: #{tpu_custom_call.1} parent=1 // pred_fallthru
      _
    // Predicated region
    $region46: #{tpu_custom_call.1} parent=1 // pred_check
      _
    $region47: #{tpu_custom_call.1} parent=1 // pred_check_branch
      %84 = sbr.rel (0) target = $region49
    $region48: #{tpu_custom_call.1} parent=1 // pred_region
      _
    $region49: #{tpu_custom_call.1} parent=1 // pred_fallthru
      _
    // Predicated region
    $region50: #{tpu_custom_call.1} parent=1 // pred_check
      _
    $region51: #{tpu_custom_call.1} parent=1 // pred_check_branch
      %86 = sbr.rel (0) target = $region53
    $region52: #{tpu_custom_call.1} parent=1 // pred_region
      %87 = dma.done [#allocation6], 384
    $region53: #{tpu_custom_call.1} parent=1 // pred_fallthru
      _
    // Predicated region
    $region54: #{tpu_custom_call.1} parent=1 // pred_check
      _
    $region55: #{tpu_custom_call.1} parent=1 // pred_check_branch
      %89 = sbr.rel (0) target = $region57
    $region56: #{tpu_custom_call.1} parent=1 // pred_region
      %90 = dma.done [#allocation8], 512
    $region57: #{tpu_custom_call.1} parent=1 // pred_fallthru
      _
    // Predicated region
    $region58: #{tpu_custom_call.1} parent=1 // pred_check
      _
    $region59: #{tpu_custom_call.1} parent=1 // pred_check_branch
      %92 = sbr.rel (0) target = $region61
    $region60: #{tpu_custom_call.1} parent=1 // pred_region
      %93 = dma.done [#allocation8], 512
    $region61: #{tpu_custom_call.1} parent=1 // pred_fallthru
      _
    // Predicated region
    $region62: #{tpu_custom_call.1} parent=1 // pred_check
      _
    $region63: #{tpu_custom_call.1} parent=1 // pred_check_branch
      %95 = sbr.rel (0) target = $region65
    $region64: #{tpu_custom_call.1} parent=1 // pred_region
      %96 = dma.done [#allocation11], 512
    $region65: #{tpu_custom_call.1} parent=1 // pred_fallthru
      _
    %v97 = vld [vmem:[#allocation5] sm:$0xff]
    %v98 = vld [vmem:[#allocation5 + $0x8] sm:$0xff]
    %v99 = vld [vmem:[#allocation5 + $0x10] sm:$0xf]
    %v100 = vld [vmem:[%s4] sm:$0xff]
    %v101 = vld [vmem:[%s4 + $0x8] sm:$0xff]
    %v102 = vld [vmem:[%s4 + $0x10] sm:$0xff]
    %v103 = vld [vmem:[%s4 + $0x18] sm:$0xff]
    %v104 = vld [vmem:[%s3] sm:$0xff]
    %v105 = vld [vmem:[%s3 + $0x8] sm:$0xff]
    %v106 = vld [vmem:[%s3 + $0x10] sm:$0xff]
    %v107 = vld [vmem:[%s3 + $0x18] sm:$0xff]
    %vm108 = vcmask 261120
    %v110 = vsel %vm108, %v97, 0
    %v113 = vsel %vm108, %v98, 0
    %v116 = vsel %vm108, %v99, 0
    %118 = vmatprep.subr.mxu0 0.0
    %119 = vmatpush1.msra.mxu0 %v104
    %120 = vmatprep.subr.mxu0 0.0
    %121 = vmatpush1.msra.mxu0 %v105
    %122 = vmatprep.subr.mxu0 0.0
    %123 = vmatpush1.msra.mxu0 %v106
    %124 = vmatprep.subr.mxu0 0.0
    %125 = vmatpush1.msra.mxu0 %v107
    %126 = vmatprep.subr.mxu0 0.0
    %127 = vmatpush1.msra.mxu0 0.0
    %128 = vmatprep.subr.mxu0 0.0
    %129 = vmatpush1.msra.mxu0 0.0
    %130 = vmatprep.subr.mxu0 0.0
    %131 = vmatpush1.msra.mxu0 0.0
    %132 = vmatprep.subr.mxu0 0.0
    %133 = vmatpush1.msra.mxu0 0.0
    %134 = vmatprep.subr.mxu0 0.0
    %135 = vmatpush1.msra.mxu0 0.0
    %136 = vmatprep.subr.mxu0 0.0
    %137 = vmatpush1.msra.mxu0 0.0
    %138 = vmatprep.subr.mxu0 0.0
    %139 = vmatpush1.msra.mxu0 0.0
    %140 = vmatprep.subr.mxu0 0.0
    %141 = vmatpush1.msra.mxu0 0.0
    %142 = vmatprep.subr.mxu0 0.0
    %143 = vmatpush1.msra.mxu0 0.0
    %144 = vmatprep.subr.mxu0 0.0
    %145 = vmatpush1.msra.mxu0 0.0
    %146 = vmatprep.subr.mxu0 0.0
    %147 = vmatpush1.msra.mxu0 0.0
    %148 = vmatprep.subr.mxu0 0.0
    %149 = vmatpush1.msra.mxu0 0.0
    %150 = vmatprep.subr.mxu0 0.0
    %151 = vmatpush1.msra.mxu0 0.0
    %152 = vmatprep.subr.mxu0 0.0
    %153 = vmatpush1.msra.mxu0 0.0
    %154 = vmatprep.subr.mxu0 0.0
    %155 = vmatpush1.msra.mxu0 0.0
    %156 = vmatprep.subr.mxu0 0.0
    %157 = vmatpush1.msra.mxu0 0.0
    %158 = vmatprep.subr.mxu0 0.0
    %159 = vmatpush1.msra.mxu0 0.0
    %160 = vmatprep.subr.mxu0 0.0
    %161 = vmatpush1.msra.mxu0 0.0
    %162 = vmatprep.subr.mxu0 0.0
    %163 = vmatpush1.msra.mxu0 0.0
    %164 = vmatprep.subr.mxu0 0.0
    %165 = vmatpush1.msra.mxu0 0.0
    %166 = vmatprep.subr.mxu0 0.0
    %167 = vmatpush1.msra.mxu0 0.0
    %168 = vmatprep.subr.mxu0 0.0
    %169 = vmatpush1.msra.mxu0 0.0
    %170 = vmatprep.subr.mxu0 0.0
    %171 = vmatpush1.msra.mxu0 0.0
    %172 = vmatprep.subr.mxu0 0.0
    %173 = vmatpush1.msra.mxu0 0.0
    %174 = vmatprep.subr.mxu0 0.0
    %175 = vmatpush1.msra.mxu0 0.0
    %176 = vmatprep.subr.mxu0 0.0
    %177 = vmatpush1.msra.mxu0 0.0
    %178 = vmatprep.subr.mxu0 0.0
    %179 = vmatpush1.msra.mxu0 0.0
    %180 = vmatprep.subr.mxu0 0.0
    %181 = vmatpush1.msra.mxu0 0.0
    %182 = vmatprep.mubr.f32.mxu0 0.0
    %183 = vmatmul.mubr.f32.gmra.mrb[0].mxu0 %v110
    %v184 = vpop.f32.mrb[0].mxu0
    %v185 = vadd.f32 0.0, %v184
    %v186 = vpop.f32.mrb[0].mxu0
    %187 = vmatprep.mubr.f32.mxu0 0.0
    %188 = vmatmul.mubr.f32.gmra.mrb[0].mxu0 %v113
    %v189 = vpop.f32.mrb[0].mxu0
    %v190 = vadd.f32 0.0, %v189
    %v191 = vpop.f32.mrb[0].mxu0
    %192 = vmatprep.mubr.f32.mxu0 0.0
    %193 = vmatmul.mubr.f32.gmra.mrb[0].mxu0 %v116
    %v194 = vpop.f32.mrb[0].mxu0
    %v195 = vadd.f32 0.0, %v194
    %v196 = vpop.f32.mrb[0].mxu0
    %197 = vdwg.mxu0
    %v198 = vlaneseq
    %v199 = vand.u32 %v198, 127
    %v200 = vld [vmem:[%s1] sm:$0xff]
    %v201 = vld [vmem:[%s1 + $0x8] sm:$0xff]
    %v202 = vld [vmem:[%s1 + $0x10] sm:$0xff]
    %v203 = vld [vmem:[%s1 + $0x18] sm:$0xff]
    %204 = vset.pattern.permute.xlu0 0
    %205 = vperm.xlu0 %204, %v200
    %v206 = vpop.permute.xlu0 %205
    %207 = vset.pattern.permute.xlu0 0
    %208 = vperm.xlu0 %207, %v201
    %v209 = vpop.permute.xlu0 %208
    %210 = vset.pattern.permute.xlu0 0
    %211 = vperm.xlu0 %210, %v202
    %v212 = vpop.permute.xlu0 %211
    %213 = vset.pattern.permute.xlu0 0
    %214 = vperm.xlu0 %213, %v203
    %v215 = vpop.permute.xlu0 %214
    %vm216 = vcmp.eq.s32.totalorder %v206, %v199
    %vm217 = vcmp.eq.s32.totalorder %v209, %v199
    %vm218 = vcmp.eq.s32.totalorder %v212, %v199
    %vm219 = vcmp.eq.s32.totalorder %v215, %v199
    %v220 = vsel %vm216, 1.0, 0.0
    %v221 = vsel %vm217, 1.0, 0.0
    %v222 = vsel %vm218, 1.0, 0.0
    %v223 = vsel %vm219, 1.0, 0.0
    %v224 = vld [vmem:[%s5] sm:$0x1]
    %v226 = vlaneseq
    %v227 = vshrl.u32 %v226, 7
    %v228 = vsub.s32 0, %v227
    %v229 = vrot.slane %v224, %v228
    %vm231 = vcmask 162816
    %v233 = vsel %vm231, %v220, 0
    %v236 = vsel %vm231, %v221, 0
    %v239 = vsel %vm231, %v222, 0
    %v242 = vsel %vm231, %v223, 0
    %vm244 = vcmask 1043456
    %v246 = vsel %vm244, %v195, 0
    %248 = vmatprep.subr.mxu0 0.0
    %249 = vmatpush1.msra.mxu0 %v185
    %250 = vmatprep.subr.mxu0 0.0
    %251 = vmatpush1.msra.mxu0 %v190
    %252 = vmatprep.subr.mxu0 0.0
    %253 = vmatpush1.msra.mxu0 %v246
    %254 = vmatprep.subr.mxu0 0.0
    %255 = vmatpush1.msra.mxu0 0.0
    %256 = vmatprep.subr.mxu0 0.0
    %257 = vmatpush1.msra.mxu0 0.0
    %258 = vmatprep.subr.mxu0 0.0
    %259 = vmatpush1.msra.mxu0 0.0
    %260 = vmatprep.subr.mxu0 0.0
    %261 = vmatpush1.msra.mxu0 0.0
    %262 = vmatprep.subr.mxu0 0.0
    %263 = vmatpush1.msra.mxu0 0.0
    %264 = vmatprep.subr.mxu0 0.0
    %265 = vmatpush1.msra.mxu0 0.0
    %266 = vmatprep.subr.mxu0 0.0
    %267 = vmatpush1.msra.mxu0 0.0
    %268 = vmatprep.subr.mxu0 0.0
    %269 = vmatpush1.msra.mxu0 0.0
    %270 = vmatprep.subr.mxu0 0.0
    %271 = vmatpush1.msra.mxu0 0.0
    %272 = vmatprep.subr.mxu0 0.0
    %273 = vmatpush1.msra.mxu0 0.0
    %274 = vmatprep.subr.mxu0 0.0
    %275 = vmatpush1.msra.mxu0 0.0
    %276 = vmatprep.subr.mxu0 0.0
    %277 = vmatpush1.msra.mxu0 0.0
    %278 = vmatprep.subr.mxu0 0.0
    %279 = vmatpush1.msra.mxu0 0.0
    %280 = vmatprep.subr.mxu0 0.0
    %281 = vmatpush1.msra.mxu0 0.0
    %282 = vmatprep.subr.mxu0 0.0
    %283 = vmatpush1.msra.mxu0 0.0
    %284 = vmatprep.subr.mxu0 0.0
    %285 = vmatpush1.msra.mxu0 0.0
    %286 = vmatprep.subr.mxu0 0.0
    %287 = vmatpush1.msra.mxu0 0.0
    %288 = vmatprep.subr.mxu0 0.0
    %289 = vmatpush1.msra.mxu0 0.0
    %290 = vmatprep.subr.mxu0 0.0
    %291 = vmatpush1.msra.mxu0 0.0
    %292 = vmatprep.subr.mxu0 0.0
    %293 = vmatpush1.msra.mxu0 0.0
    %294 = vmatprep.subr.mxu0 0.0
    %295 = vmatpush1.msra.mxu0 0.0
    %296 = vmatprep.subr.mxu0 0.0
    %297 = vmatpush1.msra.mxu0 0.0
    %298 = vmatprep.subr.mxu0 0.0
    %299 = vmatpush1.msra.mxu0 0.0
    %300 = vmatprep.subr.mxu0 0.0
    %301 = vmatpush1.msra.mxu0 0.0
    %302 = vmatprep.subr.mxu0 0.0
    %303 = vmatpush1.msra.mxu0 0.0
    %304 = vmatprep.subr.mxu0 0.0
    %305 = vmatpush1.msra.mxu0 0.0
    %306 = vmatprep.subr.mxu0 0.0
    %307 = vmatpush1.msra.mxu0 0.0
    %308 = vmatprep.subr.mxu0 0.0
    %309 = vmatpush1.msra.mxu0 0.0
    %310 = vmatprep.subr.mxu0 0.0
    %311 = vmatpush1.msra.mxu0 0.0
    %312 = vmatprep.mubr.f32.mxu0 0.0
    %313 = vmatmul.mubr.f32.gmra.mrb[0].mxu0 %v233
    %v314 = vpop.f32.mrb[0].mxu0
    %v315 = vadd.f32 %v229, %v314
    %v316 = vpop.f32.mrb[0].mxu0
    %317 = vmatprep.mubr.f32.mxu0 0.0
    %318 = vmatmul.mubr.f32.gmra.mrb[0].mxu0 %v236
    %v319 = vpop.f32.mrb[0].mxu0
    %v320 = vadd.f32 %v229, %v319
    %v321 = vpop.f32.mrb[0].mxu0
    %322 = vmatprep.mubr.f32.mxu0 0.0
    %323 = vmatmul.mubr.f32.gmra.mrb[0].mxu0 %v239
    %v324 = vpop.f32.mrb[0].mxu0
    %v325 = vadd.f32 %v229, %v324
    %v326 = vpop.f32.mrb[0].mxu0
    %327 = vmatprep.mubr.f32.mxu0 0.0
    %328 = vmatmul.mubr.f32.gmra.mrb[0].mxu0 %v242
    %v329 = vpop.f32.mrb[0].mxu0
    %v330 = vadd.f32 %v229, %v329
    %v331 = vpop.f32.mrb[0].mxu0
    %332 = vdwg.mxu0
    %vm333 = vcmp.ge.s32.totalorder %v199, 64
    %vm334 = vcmp.lt.s32.totalorder %v199, 96
    %vm335 = vmand %vm333, %vm334
    %v336 = vsel %vm335, 2.0, 1.0
    %v337 = vsel %vm335, -1.0, 0.0
    %v339 = vsel %vm108, 0.0, 0
    %341 = vmatprep.subr.mxu0 0.0
    %342 = vmatpush1.msra.mxu0 %v100
    %343 = vmatprep.subr.mxu0 0.0
    %344 = vmatpush1.msra.mxu0 %v101
    %345 = vmatprep.subr.mxu0 0.0
    %346 = vmatpush1.msra.mxu0 %v102
    %347 = vmatprep.subr.mxu0 0.0
    %348 = vmatpush1.msra.mxu0 %v103
    %349 = vmatprep.subr.mxu0 0.0
    %350 = vmatpush1.msra.mxu0 0.0
    %351 = vmatprep.subr.mxu0 0.0
    %352 = vmatpush1.msra.mxu0 0.0
    %353 = vmatprep.subr.mxu0 0.0
    %354 = vmatpush1.msra.mxu0 0.0
    %355 = vmatprep.subr.mxu0 0.0
    %356 = vmatpush1.msra.mxu0 0.0
    %357 = vmatprep.subr.mxu0 0.0
    %358 = vmatpush1.msra.mxu0 0.0
    %359 = vmatprep.subr.mxu0 0.0
    %360 = vmatpush1.msra.mxu0 0.0
    %361 = vmatprep.subr.mxu0 0.0
    %362 = vmatpush1.msra.mxu0 0.0
    %363 = vmatprep.subr.mxu0 0.0
    %364 = vmatpush1.msra.mxu0 0.0
    %365 = vmatprep.subr.mxu0 0.0
    %366 = vmatpush1.msra.mxu0 0.0
    %367 = vmatprep.subr.mxu0 0.0
    %368 = vmatpush1.msra.mxu0 0.0
    %369 = vmatprep.subr.mxu0 0.0
    %370 = vmatpush1.msra.mxu0 0.0
    %371 = vmatprep.subr.mxu0 0.0
    %372 = vmatpush1.msra.mxu0 0.0
    %373 = vmatprep.subr.mxu0 0.0
    %374 = vmatpush1.msra.mxu0 0.0
    %375 = vmatprep.subr.mxu0 0.0
    %376 = vmatpush1.msra.mxu0 0.0
    %377 = vmatprep.subr.mxu0 0.0
    %378 = vmatpush1.msra.mxu0 0.0
    %379 = vmatprep.subr.mxu0 0.0
    %380 = vmatpush1.msra.mxu0 0.0
    %381 = vmatprep.subr.mxu0 0.0
    %382 = vmatpush1.msra.mxu0 0.0
    %383 = vmatprep.subr.mxu0 0.0
    %384 = vmatpush1.msra.mxu0 0.0
    %385 = vmatprep.subr.mxu0 0.0
    %386 = vmatpush1.msra.mxu0 0.0
    %387 = vmatprep.subr.mxu0 0.0
    %388 = vmatpush1.msra.mxu0 0.0
    %389 = vmatprep.subr.mxu0 0.0
    %390 = vmatpush1.msra.mxu0 0.0
    %391 = vmatprep.subr.mxu0 0.0
    %392 = vmatpush1.msra.mxu0 0.0
    %393 = vmatprep.subr.mxu0 0.0
    %394 = vmatpush1.msra.mxu0 0.0
    %395 = vmatprep.subr.mxu0 0.0
    %396 = vmatpush1.msra.mxu0 0.0
    %397 = vmatprep.subr.mxu0 0.0
    %398 = vmatpush1.msra.mxu0 0.0
    %399 = vmatprep.subr.mxu0 0.0
    %400 = vmatpush1.msra.mxu0 0.0
    %401 = vmatprep.subr.mxu0 0.0
    %402 = vmatpush1.msra.mxu0 0.0
    %403 = vmatprep.subr.mxu0 0.0
    %404 = vmatpush1.msra.mxu0 0.0
    %405 = vmatprep.mubr.f32.mxu0 0.0
    %406 = vmatmul.mubr.f32.gmra.mrb[0].mxu0 %v339
    %v407 = vpop.f32.mrb[0].mxu0
    %v408 = vadd.f32 %v315, %v407
    %v409 = vpop.f32.mrb[0].mxu0
    %410 = vdwg.mxu0
    %v411 = vmul.f32 %v408, %v336
    %v412 = vxor.u32 %v411, 2147483648
    %v413 = vmul.f32 %v412, 1.442695
    %v414 = vpow.pop %v413
    %v415 = vadd.f32 %v414, 1.0
    %v416 = vrcp.pop %v415
    %v417 = vmul.f32 1.0, %v416
    %v418 = vmul.f32 %v417, %v336
    %v419 = vadd.f32 %v418, %v337
    %v420 = vmul.f32 %v419, 0.0
    %422 = vrot.lane.b32.xlu0 %v419, 64
    %v423 = vpop.permute.xlu0 %422
    %v425 = vmul.f32 %v419, %v423
    %427 = vrot.lane.b32.xlu0 %v425, 32
    %v428 = vpop.permute.xlu0 %427
    %v430 = vadd.f32 %v420, %v428
    %v431 = vtanh.pop %v430
    %433 = vrot.lane.b32.xlu0 %v431, 64
    %v434 = vpop.permute.xlu0 %433
    %v436 = vmul.f32 %v419, %v434
    %438 = vrot.lane.b32.xlu0 %v436, 32
    %v439 = vpop.permute.xlu0 %438
    %vm441 = vcmask 254976
    %442 = vst.msk [vmem:[#allocation2] sm:$0x3] %vm441, %v439
    %vm443 = vcmask 257026
    %444 = vst.msk [vmem:[#allocation3 - $0x2] sm:$0xc] %vm443, %v439
    %v446 = vrot.slane %v315, 4
    %v448 = vsel %vm108, %v439, 0
    %450 = vmatprep.subr.mxu0 0.0
    %451 = vmatpush1.msra.mxu0 %v100
    %452 = vmatprep.subr.mxu0 0.0
    %453 = vmatpush1.msra.mxu0 %v101
    %454 = vmatprep.subr.mxu0 0.0
    %455 = vmatpush1.msra.mxu0 %v102
    %456 = vmatprep.subr.mxu0 0.0
    %457 = vmatpush1.msra.mxu0 %v103
    %458 = vmatprep.subr.mxu0 0.0
    %459 = vmatpush1.msra.mxu0 0.0
    %460 = vmatprep.subr.mxu0 0.0
    %461 = vmatpush1.msra.mxu0 0.0
    %462 = vmatprep.subr.mxu0 0.0
    %463 = vmatpush1.msra.mxu0 0.0
    %464 = vmatprep.subr.mxu0 0.0
    %465 = vmatpush1.msra.mxu0 0.0
    %466 = vmatprep.subr.mxu0 0.0
    %467 = vmatpush1.msra.mxu0 0.0
    %468 = vmatprep.subr.mxu0 0.0
    %469 = vmatpush1.msra.mxu0 0.0
    %470 = vmatprep.subr.mxu0 0.0
    %471 = vmatpush1.msra.mxu0 0.0
    %472 = vmatprep.subr.mxu0 0.0
    %473 = vmatpush1.msra.mxu0 0.0
    %474 = vmatprep.subr.mxu0 0.0
    %475 = vmatpush1.msra.mxu0 0.0
    %476 = vmatprep.subr.mxu0 0.0
    %477 = vmatpush1.msra.mxu0 0.0
    %478 = vmatprep.subr.mxu0 0.0
    %479 = vmatpush1.msra.mxu0 0.0
    %480 = vmatprep.subr.mxu0 0.0
    %481 = vmatpush1.msra.mxu0 0.0
    %482 = vmatprep.subr.mxu0 0.0
    %483 = vmatpush1.msra.mxu0 0.0
    %484 = vmatprep.subr.mxu0 0.0
    %485 = vmatpush1.msra.mxu0 0.0
    %486 = vmatprep.subr.mxu0 0.0
    %487 = vmatpush1.msra.mxu0 0.0
    %488 = vmatprep.subr.mxu0 0.0
    %489 = vmatpush1.msra.mxu0 0.0
    %490 = vmatprep.subr.mxu0 0.0
    %491 = vmatpush1.msra.mxu0 0.0
    %492 = vmatprep.subr.mxu0 0.0
    %493 = vmatpush1.msra.mxu0 0.0
    %494 = vmatprep.subr.mxu0 0.0
    %495 = vmatpush1.msra.mxu0 0.0
    %496 = vmatprep.subr.mxu0 0.0
    %497 = vmatpush1.msra.mxu0 0.0
    %498 = vmatprep.subr.mxu0 0.0
    %499 = vmatpush1.msra.mxu0 0.0
    %500 = vmatprep.subr.mxu0 0.0
    %501 = vmatpush1.msra.mxu0 0.0
    %502 = vmatprep.subr.mxu0 0.0
    %503 = vmatpush1.msra.mxu0 0.0
    %504 = vmatprep.subr.mxu0 0.0
    %505 = vmatpush1.msra.mxu0 0.0
    %506 = vmatprep.subr.mxu0 0.0
    %507 = vmatpush1.msra.mxu0 0.0
    %508 = vmatprep.subr.mxu0 0.0
    %509 = vmatpush1.msra.mxu0 0.0
    %510 = vmatprep.subr.mxu0 0.0
    %511 = vmatpush1.msra.mxu0 0.0
    %512 = vmatprep.subr.mxu0 0.0
    %513 = vmatpush1.msra.mxu0 0.0
    %514 = vmatprep.mubr.f32.mxu0 0.0
    %515 = vmatmul.mubr.f32.gmra.mrb[0].mxu0 %v448
    %v516 = vpop.f32.mrb[0].mxu0
    %v517 = vadd.f32 %v446, %v516
    %v518 = vpop.f32.mrb[0].mxu0
    %519 = vdwg.mxu0
    %v520 = vmul.f32 %v517, %v336
    %v521 = vxor.u32 %v520, 2147483648
    %v522 = vmul.f32 %v521, 1.442695
    %v523 = vpow.pop %v522
    %v524 = vadd.f32 %v523, 1.0
    %v525 = vrcp.pop %v524
    %v526 = vmul.f32 1.0, %v525
    %v527 = vmul.f32 %v526, %v336
    %v528 = vadd.f32 %v527, %v337
    %v529 = vmul.f32 %v528, %v430
    %531 = vrot.lane.b32.xlu0 %v528, 64
    %v532 = vpop.permute.xlu0 %531
    %v534 = vmul.f32 %v528, %v532
    %536 = vrot.lane.b32.xlu0 %v534, 32
    %v537 = vpop.permute.xlu0 %536
    %v539 = vadd.f32 %v529, %v537
    %v540 = vtanh.pop %v539
    %542 = vrot.lane.b32.xlu0 %v540, 64
    %v543 = vpop.permute.xlu0 %542
    %v545 = vmul.f32 %v528, %v543
    %547 = vrot.lane.b32.xlu0 %v545, 32
    %v548 = vpop.permute.xlu0 %547
    %550 = vst.msk [vmem:[#allocation2 + $0x2] sm:$0x3] %vm441, %v548
    %551 = vst.msk [vmem:[#allocation3] sm:$0xc] %vm443, %v548
    %v552 = vsel %vm108, %v548, 0
    %554 = vmatprep.subr.mxu0 0.0
    %555 = vmatpush1.msra.mxu0 %v100
    %556 = vmatprep.subr.mxu0 0.0
    %557 = vmatpush1.msra.mxu0 %v101
    %558 = vmatprep.subr.mxu0 0.0
    %559 = vmatpush1.msra.mxu0 %v102
    %560 = vmatprep.subr.mxu0 0.0
    %561 = vmatpush1.msra.mxu0 %v103
    %562 = vmatprep.subr.mxu0 0.0
    %563 = vmatpush1.msra.mxu0 0.0
    %564 = vmatprep.subr.mxu0 0.0
    %565 = vmatpush1.msra.mxu0 0.0
    %566 = vmatprep.subr.mxu0 0.0
    %567 = vmatpush1.msra.mxu0 0.0
    %568 = vmatprep.subr.mxu0 0.0
    %569 = vmatpush1.msra.mxu0 0.0
    %570 = vmatprep.subr.mxu0 0.0
    %571 = vmatpush1.msra.mxu0 0.0
    %572 = vmatprep.subr.mxu0 0.0
    %573 = vmatpush1.msra.mxu0 0.0
    %574 = vmatprep.subr.mxu0 0.0
    %575 = vmatpush1.msra.mxu0 0.0
    %576 = vmatprep.subr.mxu0 0.0
    %577 = vmatpush1.msra.mxu0 0.0
    %578 = vmatprep.subr.mxu0 0.0
    %579 = vmatpush1.msra.mxu0 0.0
    %580 = vmatprep.subr.mxu0 0.0
    %581 = vmatpush1.msra.mxu0 0.0
    %582 = vmatprep.subr.mxu0 0.0
    %583 = vmatpush1.msra.mxu0 0.0
    %584 = vmatprep.subr.mxu0 0.0
    %585 = vmatpush1.msra.mxu0 0.0
    %586 = vmatprep.subr.mxu0 0.0
    %587 = vmatpush1.msra.mxu0 0.0
    %588 = vmatprep.subr.mxu0 0.0
    %589 = vmatpush1.msra.mxu0 0.0
    %590 = vmatprep.subr.mxu0 0.0
    %591 = vmatpush1.msra.mxu0 0.0
    %592 = vmatprep.subr.mxu0 0.0
    %593 = vmatpush1.msra.mxu0 0.0
    %594 = vmatprep.subr.mxu0 0.0
    %595 = vmatpush1.msra.mxu0 0.0
    %596 = vmatprep.subr.mxu0 0.0
    %597 = vmatpush1.msra.mxu0 0.0
    %598 = vmatprep.subr.mxu0 0.0
    %599 = vmatpush1.msra.mxu0 0.0
    %600 = vmatprep.subr.mxu0 0.0
    %601 = vmatpush1.msra.mxu0 0.0
    %602 = vmatprep.subr.mxu0 0.0
    %603 = vmatpush1.msra.mxu0 0.0
    %604 = vmatprep.subr.mxu0 0.0
    %605 = vmatpush1.msra.mxu0 0.0
    %606 = vmatprep.subr.mxu0 0.0
    %607 = vmatpush1.msra.mxu0 0.0
    %608 = vmatprep.subr.mxu0 0.0
    %609 = vmatpush1.msra.mxu0 0.0
    %610 = vmatprep.subr.mxu0 0.0
    %611 = vmatpush1.msra.mxu0 0.0
    %612 = vmatprep.subr.mxu0 0.0
    %613 = vmatpush1.msra.mxu0 0.0
    %614 = vmatprep.subr.mxu0 0.0
    %615 = vmatpush1.msra.mxu0 0.0
    %616 = vmatprep.subr.mxu0 0.0
    %617 = vmatpush1.msra.mxu0 0.0
    %618 = vmatprep.mubr.f32.mxu0 0.0
    %619 = vmatmul.mubr.f32.gmra.mrb[0].mxu0 %v552
    %v620 = vpop.f32.mrb[0].mxu0
    %v621 = vadd.f32 %v320, %v620
    %v622 = vpop.f32.mrb[0].mxu0
    %623 = vdwg.mxu0
    %v624 = vmul.f32 %v621, %v336
    %v625 = vxor.u32 %v624, 2147483648
    %v626 = vmul.f32 %v625, 1.442695
    %v627 = vpow.pop %v626
    %v628 = vadd.f32 %v627, 1.0
    %v629 = vrcp.pop %v628
    %v630 = vmul.f32 1.0, %v629
    %v631 = vmul.f32 %v630, %v336
    %v632 = vadd.f32 %v631, %v337
    %v633 = vmul.f32 %v632, %v539
    %635 = vrot.lane.b32.xlu0 %v632, 64
    %v636 = vpop.permute.xlu0 %635
    %v638 = vmul.f32 %v632, %v636
    %640 = vrot.lane.b32.xlu0 %v638, 32
    %v641 = vpop.permute.xlu0 %640
    %v643 = vadd.f32 %v633, %v641
    %v644 = vtanh.pop %v643
    %646 = vrot.lane.b32.xlu0 %v644, 64
    %v647 = vpop.permute.xlu0 %646
    %v649 = vmul.f32 %v632, %v647
    %651 = vrot.lane.b32.xlu0 %v649, 32
    %v652 = vpop.permute.xlu0 %651
    %654 = vst.msk [vmem:[#allocation2 + $0x4] sm:$0x3] %vm441, %v652
    %655 = vst.msk [vmem:[#allocation3 + $0x2] sm:$0xc] %vm443, %v652
    %v657 = vrot.slane %v320, 4
    %v659 = vsel %vm108, %v652, 0
    %661 = vmatprep.subr.mxu0 0.0
    %662 = vmatpush1.msra.mxu0 %v100
    %663 = vmatprep.subr.mxu0 0.0
    %664 = vmatpush1.msra.mxu0 %v101
    %665 = vmatprep.subr.mxu0 0.0
    %666 = vmatpush1.msra.mxu0 %v102
    %667 = vmatprep.subr.mxu0 0.0
    %668 = vmatpush1.msra.mxu0 %v103
    %669 = vmatprep.subr.mxu0 0.0
    %670 = vmatpush1.msra.mxu0 0.0
    %671 = vmatprep.subr.mxu0 0.0
    %672 = vmatpush1.msra.mxu0 0.0
    %673 = vmatprep.subr.mxu0 0.0
    %674 = vmatpush1.msra.mxu0 0.0
    %675 = vmatprep.subr.mxu0 0.0
    %676 = vmatpush1.msra.mxu0 0.0
    %677 = vmatprep.subr.mxu0 0.0
    %678 = vmatpush1.msra.mxu0 0.0
    %679 = vmatprep.subr.mxu0 0.0
    %680 = vmatpush1.msra.mxu0 0.0
    %681 = vmatprep.subr.mxu0 0.0
    %682 = vmatpush1.msra.mxu0 0.0
    %683 = vmatprep.subr.mxu0 0.0
    %684 = vmatpush1.msra.mxu0 0.0
    %685 = vmatprep.subr.mxu0 0.0
    %686 = vmatpush1.msra.mxu0 0.0
    %687 = vmatprep.subr.mxu0 0.0
    %688 = vmatpush1.msra.mxu0 0.0
    %689 = vmatprep.subr.mxu0 0.0
    %690 = vmatpush1.msra.mxu0 0.0
    %691 = vmatprep.subr.mxu0 0.0
    %692 = vmatpush1.msra.mxu0 0.0
    %693 = vmatprep.subr.mxu0 0.0
    %694 = vmatpush1.msra.mxu0 0.0
    %695 = vmatprep.subr.mxu0 0.0
    %696 = vmatpush1.msra.mxu0 0.0
    %697 = vmatprep.subr.mxu0 0.0
    %698 = vmatpush1.msra.mxu0 0.0
    %699 = vmatprep.subr.mxu0 0.0
    %700 = vmatpush1.msra.mxu0 0.0
    %701 = vmatprep.subr.mxu0 0.0
    %702 = vmatpush1.msra.mxu0 0.0
    %703 = vmatprep.subr.mxu0 0.0
    %704 = vmatpush1.msra.mxu0 0.0
    %705 = vmatprep.subr.mxu0 0.0
    %706 = vmatpush1.msra.mxu0 0.0
    %707 = vmatprep.subr.mxu0 0.0
    %708 = vmatpush1.msra.mxu0 0.0
    %709 = vmatprep.subr.mxu0 0.0
    %710 = vmatpush1.msra.mxu0 0.0
    %711 = vmatprep.subr.mxu0 0.0
    %712 = vmatpush1.msra.mxu0 0.0
    %713 = vmatprep.subr.mxu0 0.0
    %714 = vmatpush1.msra.mxu0 0.0
    %715 = vmatprep.subr.mxu0 0.0
    %716 = vmatpush1.msra.mxu0 0.0
    %717 = vmatprep.subr.mxu0 0.0
    %718 = vmatpush1.msra.mxu0 0.0
    %719 = vmatprep.subr.mxu0 0.0
    %720 = vmatpush1.msra.mxu0 0.0
    %721 = vmatprep.subr.mxu0 0.0
    %722 = vmatpush1.msra.mxu0 0.0
    %723 = vmatprep.subr.mxu0 0.0
    %724 = vmatpush1.msra.mxu0 0.0
    %725 = vmatprep.mubr.f32.mxu0 0.0
    %726 = vmatmul.mubr.f32.gmra.mrb[0].mxu0 %v659
    %v727 = vpop.f32.mrb[0].mxu0
    %v728 = vadd.f32 %v657, %v727
    %v729 = vpop.f32.mrb[0].mxu0
    %730 = vdwg.mxu0
    %v731 = vmul.f32 %v728, %v336
    %v732 = vxor.u32 %v731, 2147483648
    %v733 = vmul.f32 %v732, 1.442695
    %v734 = vpow.pop %v733
    %v735 = vadd.f32 %v734, 1.0
    %v736 = vrcp.pop %v735
    %v737 = vmul.f32 1.0, %v736
    %v738 = vmul.f32 %v737, %v336
    %v739 = vadd.f32 %v738, %v337
    %v740 = vmul.f32 %v739, %v643
    %742 = vrot.lane.b32.xlu0 %v739, 64
    %v743 = vpop.permute.xlu0 %742
    %v745 = vmul.f32 %v739, %v743
    %747 = vrot.lane.b32.xlu0 %v745, 32
    %v748 = vpop.permute.xlu0 %747
    %v750 = vadd.f32 %v740, %v748
    %v751 = vtanh.pop %v750
    %753 = vrot.lane.b32.xlu0 %v751, 64
    %v754 = vpop.permute.xlu0 %753
    %v756 = vmul.f32 %v739, %v754
    %758 = vrot.lane.b32.xlu0 %v756, 32
    %v759 = vpop.permute.xlu0 %758
    %761 = vst.msk [vmem:[#allocation2 + $0x6] sm:$0x3] %vm441, %v759
    %762 = vst.msk [vmem:[#allocation3 + $0x4] sm:$0xc] %vm443, %v759
    %v763 = vsel %vm108, %v759, 0
    %765 = vmatprep.subr.mxu0 0.0
    %766 = vmatpush1.msra.mxu0 %v100
    %767 = vmatprep.subr.mxu0 0.0
    %768 = vmatpush1.msra.mxu0 %v101
    %769 = vmatprep.subr.mxu0 0.0
    %770 = vmatpush1.msra.mxu0 %v102
    %771 = vmatprep.subr.mxu0 0.0
    %772 = vmatpush1.msra.mxu0 %v103
    %773 = vmatprep.subr.mxu0 0.0
    %774 = vmatpush1.msra.mxu0 0.0
    %775 = vmatprep.subr.mxu0 0.0
    %776 = vmatpush1.msra.mxu0 0.0
    %777 = vmatprep.subr.mxu0 0.0
    %778 = vmatpush1.msra.mxu0 0.0
    %779 = vmatprep.subr.mxu0 0.0
    %780 = vmatpush1.msra.mxu0 0.0
    %781 = vmatprep.subr.mxu0 0.0
    %782 = vmatpush1.msra.mxu0 0.0
    %783 = vmatprep.subr.mxu0 0.0
    %784 = vmatpush1.msra.mxu0 0.0
    %785 = vmatprep.subr.mxu0 0.0
    %786 = vmatpush1.msra.mxu0 0.0
    %787 = vmatprep.subr.mxu0 0.0
    %788 = vmatpush1.msra.mxu0 0.0
    %789 = vmatprep.subr.mxu0 0.0
    %790 = vmatpush1.msra.mxu0 0.0
    %791 = vmatprep.subr.mxu0 0.0
    %792 = vmatpush1.msra.mxu0 0.0
    %793 = vmatprep.subr.mxu0 0.0
    %794 = vmatpush1.msra.mxu0 0.0
    %795 = vmatprep.subr.mxu0 0.0
    %796 = vmatpush1.msra.mxu0 0.0
    %797 = vmatprep.subr.mxu0 0.0
    %798 = vmatpush1.msra.mxu0 0.0
    %799 = vmatprep.subr.mxu0 0.0
    %800 = vmatpush1.msra.mxu0 0.0
    %801 = vmatprep.subr.mxu0 0.0
    %802 = vmatpush1.msra.mxu0 0.0
    %803 = vmatprep.subr.mxu0 0.0
    %804 = vmatpush1.msra.mxu0 0.0
    %805 = vmatprep.subr.mxu0 0.0
    %806 = vmatpush1.msra.mxu0 0.0
    %807 = vmatprep.subr.mxu0 0.0
    %808 = vmatpush1.msra.mxu0 0.0
    %809 = vmatprep.subr.mxu0 0.0
    %810 = vmatpush1.msra.mxu0 0.0
    %811 = vmatprep.subr.mxu0 0.0
    %812 = vmatpush1.msra.mxu0 0.0
    %813 = vmatprep.subr.mxu0 0.0
    %814 = vmatpush1.msra.mxu0 0.0
    %815 = vmatprep.subr.mxu0 0.0
    %816 = vmatpush1.msra.mxu0 0.0
    %817 = vmatprep.subr.mxu0 0.0
    %818 = vmatpush1.msra.mxu0 0.0
    %819 = vmatprep.subr.mxu0 0.0
    %820 = vmatpush1.msra.mxu0 0.0
    %821 = vmatprep.subr.mxu0 0.0
    %822 = vmatpush1.msra.mxu0 0.0
    %823 = vmatprep.subr.mxu0 0.0
    %824 = vmatpush1.msra.mxu0 0.0
    %825 = vmatprep.subr.mxu0 0.0
    %826 = vmatpush1.msra.mxu0 0.0
    %827 = vmatprep.subr.mxu0 0.0
    %828 = vmatpush1.msra.mxu0 0.0
    %829 = vmatprep.mubr.f32.mxu0 0.0
    %830 = vmatmul.mubr.f32.gmra.mrb[0].mxu0 %v763
    %v831 = vpop.f32.mrb[0].mxu0
    %v832 = vadd.f32 %v325, %v831
    %v833 = vpop.f32.mrb[0].mxu0
    %834 = vdwg.mxu0
    %v835 = vmul.f32 %v832, %v336
    %v836 = vxor.u32 %v835, 2147483648
    %v837 = vmul.f32 %v836, 1.442695
    %v838 = vpow.pop %v837
    %v839 = vadd.f32 %v838, 1.0
    %v840 = vrcp.pop %v839
    %v841 = vmul.f32 1.0, %v840
    %v842 = vmul.f32 %v841, %v336
    %v843 = vadd.f32 %v842, %v337
    %v844 = vmul.f32 %v843, %v750
    %846 = vrot.lane.b32.xlu0 %v843, 64
    %v847 = vpop.permute.xlu0 %846
    %v849 = vmul.f32 %v843, %v847
    %851 = vrot.lane.b32.xlu0 %v849, 32
    %v852 = vpop.permute.xlu0 %851
    %v854 = vadd.f32 %v844, %v852
    %v855 = vtanh.pop %v854
    %857 = vrot.lane.b32.xlu0 %v855, 64
    %v858 = vpop.permute.xlu0 %857
    %v860 = vmul.f32 %v843, %v858
    %862 = vrot.lane.b32.xlu0 %v860, 32
    %v863 = vpop.permute.xlu0 %862
    %865 = vst.msk [vmem:[#allocation2 + $0x8] sm:$0x3] %vm441, %v863
    %866 = vst.msk [vmem:[#allocation3 + $0x6] sm:$0xc] %vm443, %v863
    %v868 = vrot.slane %v325, 4
    %v870 = vsel %vm108, %v863, 0
    %872 = vmatprep.subr.mxu0 0.0
    %873 = vmatpush1.msra.mxu0 %v100
    %874 = vmatprep.subr.mxu0 0.0
    %875 = vmatpush1.msra.mxu0 %v101
    %876 = vmatprep.subr.mxu0 0.0
    %877 = vmatpush1.msra.mxu0 %v102
    %878 = vmatprep.subr.mxu0 0.0
    %879 = vmatpush1.msra.mxu0 %v103
    %880 = vmatprep.subr.mxu0 0.0
    %881 = vmatpush1.msra.mxu0 0.0
    %882 = vmatprep.subr.mxu0 0.0
    %883 = vmatpush1.msra.mxu0 0.0
    %884 = vmatprep.subr.mxu0 0.0
    %885 = vmatpush1.msra.mxu0 0.0
    %886 = vmatprep.subr.mxu0 0.0
    %887 = vmatpush1.msra.mxu0 0.0
    %888 = vmatprep.subr.mxu0 0.0
    %889 = vmatpush1.msra.mxu0 0.0
    %890 = vmatprep.subr.mxu0 0.0
    %891 = vmatpush1.msra.mxu0 0.0
    %892 = vmatprep.subr.mxu0 0.0
    %893 = vmatpush1.msra.mxu0 0.0
    %894 = vmatprep.subr.mxu0 0.0
    %895 = vmatpush1.msra.mxu0 0.0
    %896 = vmatprep.subr.mxu0 0.0
    %897 = vmatpush1.msra.mxu0 0.0
    %898 = vmatprep.subr.mxu0 0.0
    %899 = vmatpush1.msra.mxu0 0.0
    %900 = vmatprep.subr.mxu0 0.0
    %901 = vmatpush1.msra.mxu0 0.0
    %902 = vmatprep.subr.mxu0 0.0
    %903 = vmatpush1.msra.mxu0 0.0
    %904 = vmatprep.subr.mxu0 0.0
    %905 = vmatpush1.msra.mxu0 0.0
    %906 = vmatprep.subr.mxu0 0.0
    %907 = vmatpush1.msra.mxu0 0.0
    %908 = vmatprep.subr.mxu0 0.0
    %909 = vmatpush1.msra.mxu0 0.0
    %910 = vmatprep.subr.mxu0 0.0
    %911 = vmatpush1.msra.mxu0 0.0
    %912 = vmatprep.subr.mxu0 0.0
    %913 = vmatpush1.msra.mxu0 0.0
    %914 = vmatprep.subr.mxu0 0.0
    %915 = vmatpush1.msra.mxu0 0.0
    %916 = vmatprep.subr.mxu0 0.0
    %917 = vmatpush1.msra.mxu0 0.0
    %918 = vmatprep.subr.mxu0 0.0
    %919 = vmatpush1.msra.mxu0 0.0
    %920 = vmatprep.subr.mxu0 0.0
    %921 = vmatpush1.msra.mxu0 0.0
    %922 = vmatprep.subr.mxu0 0.0
    %923 = vmatpush1.msra.mxu0 0.0
    %924 = vmatprep.subr.mxu0 0.0
    %925 = vmatpush1.msra.mxu0 0.0
    %926 = vmatprep.subr.mxu0 0.0
    %927 = vmatpush1.msra.mxu0 0.0
    %928 = vmatprep.subr.mxu0 0.0
    %929 = vmatpush1.msra.mxu0 0.0
    %930 = vmatprep.subr.mxu0 0.0
    %931 = vmatpush1.msra.mxu0 0.0
    %932 = vmatprep.subr.mxu0 0.0
    %933 = vmatpush1.msra.mxu0 0.0
    %934 = vmatprep.subr.mxu0 0.0
    %935 = vmatpush1.msra.mxu0 0.0
    %936 = vmatprep.mubr.f32.mxu0 0.0
    %937 = vmatmul.mubr.f32.gmra.mrb[0].mxu0 %v870
    %v938 = vpop.f32.mrb[0].mxu0
    %v939 = vadd.f32 %v868, %v938
    %v940 = vpop.f32.mrb[0].mxu0
    %941 = vdwg.mxu0
    %v942 = vmul.f32 %v939, %v336
    %v943 = vxor.u32 %v942, 2147483648
    %v944 = vmul.f32 %v943, 1.442695
    %v945 = vpow.pop %v944
    %v946 = vadd.f32 %v945, 1.0
    %v947 = vrcp.pop %v946
    %v948 = vmul.f32 1.0, %v947
    %v949 = vmul.f32 %v948, %v336
    %v950 = vadd.f32 %v949, %v337
    %v951 = vmul.f32 %v950, %v854
    %953 = vrot.lane.b32.xlu0 %v950, 64
    %v954 = vpop.permute.xlu0 %953
    %v956 = vmul.f32 %v950, %v954
    %958 = vrot.lane.b32.xlu0 %v956, 32
    %v959 = vpop.permute.xlu0 %958
    %v961 = vadd.f32 %v951, %v959
    %v962 = vtanh.pop %v961
    %964 = vrot.lane.b32.xlu0 %v962, 64
    %v965 = vpop.permute.xlu0 %964
    %v967 = vmul.f32 %v950, %v965
    %969 = vrot.lane.b32.xlu0 %v967, 32
    %v970 = vpop.permute.xlu0 %969
    %972 = vst.msk [vmem:[#allocation2 + $0xa] sm:$0x3] %vm441, %v970
    %973 = vst.msk [vmem:[#allocation3 + $0x8] sm:$0xc] %vm443, %v970
    %v974 = vsel %vm108, %v970, 0
    %976 = vmatprep.subr.mxu0 0.0
    %977 = vmatpush1.msra.mxu0 %v100
    %978 = vmatprep.subr.mxu0 0.0
    %979 = vmatpush1.msra.mxu0 %v101
    %980 = vmatprep.subr.mxu0 0.0
    %981 = vmatpush1.msra.mxu0 %v102
    %982 = vmatprep.subr.mxu0 0.0
    %983 = vmatpush1.msra.mxu0 %v103
    %984 = vmatprep.subr.mxu0 0.0
    %985 = vmatpush1.msra.mxu0 0.0
    %986 = vmatprep.subr.mxu0 0.0
    %987 = vmatpush1.msra.mxu0 0.0
    %988 = vmatprep.subr.mxu0 0.0
    %989 = vmatpush1.msra.mxu0 0.0
    %990 = vmatprep.subr.mxu0 0.0
    %991 = vmatpush1.msra.mxu0 0.0
    %992 = vmatprep.subr.mxu0 0.0
    %993 = vmatpush1.msra.mxu0 0.0
    %994 = vmatprep.subr.mxu0 0.0
    %995 = vmatpush1.msra.mxu0 0.0
    %996 = vmatprep.subr.mxu0 0.0
    %997 = vmatpush1.msra.mxu0 0.0
    %998 = vmatprep.subr.mxu0 0.0
    %999 = vmatpush1.msra.mxu0 0.0
    %1000 = vmatprep.subr.mxu0 0.0
    %1001 = vmatpush1.msra.mxu0 0.0
    %1002 = vmatprep.subr.mxu0 0.0
    %1003 = vmatpush1.msra.mxu0 0.0
    %1004 = vmatprep.subr.mxu0 0.0
    %1005 = vmatpush1.msra.mxu0 0.0
    %1006 = vmatprep.subr.mxu0 0.0
    %1007 = vmatpush1.msra.mxu0 0.0
    %1008 = vmatprep.subr.mxu0 0.0
    %1009 = vmatpush1.msra.mxu0 0.0
    %1010 = vmatprep.subr.mxu0 0.0
    %1011 = vmatpush1.msra.mxu0 0.0
    %1012 = vmatprep.subr.mxu0 0.0
    %1013 = vmatpush1.msra.mxu0 0.0
    %1014 = vmatprep.subr.mxu0 0.0
    %1015 = vmatpush1.msra.mxu0 0.0
    %1016 = vmatprep.subr.mxu0 0.0
    %1017 = vmatpush1.msra.mxu0 0.0
    %1018 = vmatprep.subr.mxu0 0.0
    %1019 = vmatpush1.msra.mxu0 0.0
    %1020 = vmatprep.subr.mxu0 0.0
    %1021 = vmatpush1.msra.mxu0 0.0
    %1022 = vmatprep.subr.mxu0 0.0
    %1023 = vmatpush1.msra.mxu0 0.0
    %1024 = vmatprep.subr.mxu0 0.0
    %1025 = vmatpush1.msra.mxu0 0.0
    %1026 = vmatprep.subr.mxu0 0.0
    %1027 = vmatpush1.msra.mxu0 0.0
    %1028 = vmatprep.subr.mxu0 0.0
    %1029 = vmatpush1.msra.mxu0 0.0
    %1030 = vmatprep.subr.mxu0 0.0
    %1031 = vmatpush1.msra.mxu0 0.0
    %1032 = vmatprep.subr.mxu0 0.0
    %1033 = vmatpush1.msra.mxu0 0.0
    %1034 = vmatprep.subr.mxu0 0.0
    %1035 = vmatpush1.msra.mxu0 0.0
    %1036 = vmatprep.subr.mxu0 0.0
    %1037 = vmatpush1.msra.mxu0 0.0
    %1038 = vmatprep.subr.mxu0 0.0
    %1039 = vmatpush1.msra.mxu0 0.0
    %1040 = vmatprep.mubr.f32.mxu0 0.0
    %1041 = vmatmul.mubr.f32.gmra.mrb[0].mxu0 %v974
    %v1042 = vpop.f32.mrb[0].mxu0
    %v1043 = vadd.f32 %v330, %v1042
    %v1044 = vpop.f32.mrb[0].mxu0
    %1045 = vdwg.mxu0
    %v1046 = vmul.f32 %v1043, %v336
    %v1047 = vxor.u32 %v1046, 2147483648
    %v1048 = vmul.f32 %v1047, 1.442695
    %v1049 = vpow.pop %v1048
    %v1050 = vadd.f32 %v1049, 1.0
    %v1051 = vrcp.pop %v1050
    %v1052 = vmul.f32 1.0, %v1051
    %v1053 = vmul.f32 %v1052, %v336
    %v1054 = vadd.f32 %v1053, %v337
    %v1055 = vmul.f32 %v1054, %v961
    %1057 = vrot.lane.b32.xlu0 %v1054, 64
    %v1058 = vpop.permute.xlu0 %1057
    %v1060 = vmul.f32 %v1054, %v1058
    %1062 = vrot.lane.b32.xlu0 %v1060, 32
    %v1063 = vpop.permute.xlu0 %1062
    %v1065 = vadd.f32 %v1055, %v1063
    %v1066 = vtanh.pop %v1065
    %1068 = vrot.lane.b32.xlu0 %v1066, 64
    %v1069 = vpop.permute.xlu0 %1068
    %v1071 = vmul.f32 %v1054, %v1069
    %1073 = vrot.lane.b32.xlu0 %v1071, 32
    %v1074 = vpop.permute.xlu0 %1073
    %1076 = vst.msk [vmem:[#allocation2 + $0xc] sm:$0x3] %vm441, %v1074
    %1077 = vst.msk [vmem:[#allocation3 + $0xa] sm:$0xc] %vm443, %v1074
    %v1079 = vrot.slane %v330, 4
    %v1081 = vsel %vm108, %v1074, 0
    %1083 = vmatprep.subr.mxu0 0.0
    %1084 = vmatpush1.msra.mxu0 %v100
    %1085 = vmatprep.subr.mxu0 0.0
    %1086 = vmatpush1.msra.mxu0 %v101
    %1087 = vmatprep.subr.mxu0 0.0
    %1088 = vmatpush1.msra.mxu0 %v102
    %1089 = vmatprep.subr.mxu0 0.0
    %1090 = vmatpush1.msra.mxu0 %v103
    %1091 = vmatprep.subr.mxu0 0.0
    %1092 = vmatpush1.msra.mxu0 0.0
    %1093 = vmatprep.subr.mxu0 0.0
    %1094 = vmatpush1.msra.mxu0 0.0
    %1095 = vmatprep.subr.mxu0 0.0
    %1096 = vmatpush1.msra.mxu0 0.0
    %1097 = vmatprep.subr.mxu0 0.0
    %1098 = vmatpush1.msra.mxu0 0.0
    %1099 = vmatprep.subr.mxu0 0.0
    %1100 = vmatpush1.msra.mxu0 0.0
    %1101 = vmatprep.subr.mxu0 0.0
    %1102 = vmatpush1.msra.mxu0 0.0
    %1103 = vmatprep.subr.mxu0 0.0
    %1104 = vmatpush1.msra.mxu0 0.0
    %1105 = vmatprep.subr.mxu0 0.0
    %1106 = vmatpush1.msra.mxu0 0.0
    %1107 = vmatprep.subr.mxu0 0.0
    %1108 = vmatpush1.msra.mxu0 0.0
    %1109 = vmatprep.subr.mxu0 0.0
    %1110 = vmatpush1.msra.mxu0 0.0
    %1111 = vmatprep.subr.mxu0 0.0
    %1112 = vmatpush1.msra.mxu0 0.0
    %1113 = vmatprep.subr.mxu0 0.0
    %1114 = vmatpush1.msra.mxu0 0.0
    %1115 = vmatprep.subr.mxu0 0.0
    %1116 = vmatpush1.msra.mxu0 0.0
    %1117 = vmatprep.subr.mxu0 0.0
    %1118 = vmatpush1.msra.mxu0 0.0
    %1119 = vmatprep.subr.mxu0 0.0
    %1120 = vmatpush1.msra.mxu0 0.0
    %1121 = vmatprep.subr.mxu0 0.0
    %1122 = vmatpush1.msra.mxu0 0.0
    %1123 = vmatprep.subr.mxu0 0.0
    %1124 = vmatpush1.msra.mxu0 0.0
    %1125 = vmatprep.subr.mxu0 0.0
    %1126 = vmatpush1.msra.mxu0 0.0
    %1127 = vmatprep.subr.mxu0 0.0
    %1128 = vmatpush1.msra.mxu0 0.0
    %1129 = vmatprep.subr.mxu0 0.0
    %1130 = vmatpush1.msra.mxu0 0.0
    %1131 = vmatprep.subr.mxu0 0.0
    %1132 = vmatpush1.msra.mxu0 0.0
    %1133 = vmatprep.subr.mxu0 0.0
    %1134 = vmatpush1.msra.mxu0 0.0
    %1135 = vmatprep.subr.mxu0 0.0
    %1136 = vmatpush1.msra.mxu0 0.0
    %1137 = vmatprep.subr.mxu0 0.0
    %1138 = vmatpush1.msra.mxu0 0.0
    %1139 = vmatprep.subr.mxu0 0.0
    %1140 = vmatpush1.msra.mxu0 0.0
    %1141 = vmatprep.subr.mxu0 0.0
    %1142 = vmatpush1.msra.mxu0 0.0
    %1143 = vmatprep.subr.mxu0 0.0
    %1144 = vmatpush1.msra.mxu0 0.0
    %1145 = vmatprep.subr.mxu0 0.0
    %1146 = vmatpush1.msra.mxu0 0.0
    %1147 = vmatprep.mubr.f32.mxu0 0.0
    %1148 = vmatmul.mubr.f32.gmra.mrb[0].mxu0 %v1081
    %v1149 = vpop.f32.mrb[0].mxu0
    %v1150 = vadd.f32 %v1079, %v1149
    %v1151 = vpop.f32.mrb[0].mxu0
    %1152 = vdwg.mxu0
    %v1153 = vmul.f32 %v1150, %v336
    %v1154 = vxor.u32 %v1153, 2147483648
    %v1155 = vmul.f32 %v1154, 1.442695
    %v1156 = vpow.pop %v1155
    %v1157 = vadd.f32 %v1156, 1.0
    %v1158 = vrcp.pop %v1157
    %v1159 = vmul.f32 1.0, %v1158
    %v1160 = vmul.f32 %v1159, %v336
    %v1161 = vadd.f32 %v1160, %v337
    %v1162 = vmul.f32 %v1161, %v1065
    %1164 = vrot.lane.b32.xlu0 %v1161, 64
    %v1165 = vpop.permute.xlu0 %1164
    %v1167 = vmul.f32 %v1161, %v1165
    %1169 = vrot.lane.b32.xlu0 %v1167, 32
    %v1170 = vpop.permute.xlu0 %1169
    %v1172 = vadd.f32 %v1162, %v1170
    %v1173 = vtanh.pop %v1172
    %1175 = vrot.lane.b32.xlu0 %v1173, 64
    %v1176 = vpop.permute.xlu0 %1175
    %v1178 = vmul.f32 %v1161, %v1176
    %1180 = vrot.lane.b32.xlu0 %v1178, 32
    %v1181 = vpop.permute.xlu0 %1180
    %1183 = vst.msk [vmem:[#allocation2 + $0xe] sm:$0x3] %vm441, %v1181
    %1184 = vst.msk [vmem:[#allocation3 + $0xc] sm:$0xc] %vm443, %v1181
    %v1185 = vld [vmem:[#allocation7] sm:$0xff]
    %v1186 = vld [vmem:[#allocation7 + $0x8] sm:$0xff]
    %v1187 = vld [vmem:[#allocation7 + $0x10] sm:$0xff]
    %v1188 = vld [vmem:[#allocation7 + $0x18] sm:$0xff]
    %1189 = vmatprep.subr.mxu0 0.0
    %1190 = vmatpush1.msra.mxu0 %v1185
    %1191 = vmatprep.subr.mxu0 0.0
    %1192 = vmatpush1.msra.mxu0 %v1186
    %1193 = vmatprep.subr.mxu0 0.0
    %1194 = vmatpush1.msra.mxu0 %v1187
    %1195 = vmatprep.subr.mxu0 0.0
    %1196 = vmatpush1.msra.mxu0 %v1188
    %1197 = vmatprep.subr.mxu0 0.0
    %1198 = vmatpush1.msra.mxu0 0.0
    %1199 = vmatprep.subr.mxu0 0.0
    %1200 = vmatpush1.msra.mxu0 0.0
    %1201 = vmatprep.subr.mxu0 0.0
    %1202 = vmatpush1.msra.mxu0 0.0
    %1203 = vmatprep.subr.mxu0 0.0
    %1204 = vmatpush1.msra.mxu0 0.0
    %1205 = vmatprep.subr.mxu0 0.0
    %1206 = vmatpush1.msra.mxu0 0.0
    %1207 = vmatprep.subr.mxu0 0.0
    %1208 = vmatpush1.msra.mxu0 0.0
    %1209 = vmatprep.subr.mxu0 0.0
    %1210 = vmatpush1.msra.mxu0 0.0
    %1211 = vmatprep.subr.mxu0 0.0
    %1212 = vmatpush1.msra.mxu0 0.0
    %1213 = vmatprep.subr.mxu0 0.0
    %1214 = vmatpush1.msra.mxu0 0.0
    %1215 = vmatprep.subr.mxu0 0.0
    %1216 = vmatpush1.msra.mxu0 0.0
    %1217 = vmatprep.subr.mxu0 0.0
    %1218 = vmatpush1.msra.mxu0 0.0
    %1219 = vmatprep.subr.mxu0 0.0
    %1220 = vmatpush1.msra.mxu0 0.0
    %1221 = vmatprep.subr.mxu0 0.0
    %1222 = vmatpush1.msra.mxu0 0.0
    %1223 = vmatprep.subr.mxu0 0.0
    %1224 = vmatpush1.msra.mxu0 0.0
    %1225 = vmatprep.subr.mxu0 0.0
    %1226 = vmatpush1.msra.mxu0 0.0
    %1227 = vmatprep.subr.mxu0 0.0
    %1228 = vmatpush1.msra.mxu0 0.0
    %1229 = vmatprep.subr.mxu0 0.0
    %1230 = vmatpush1.msra.mxu0 0.0
    %1231 = vmatprep.subr.mxu0 0.0
    %1232 = vmatpush1.msra.mxu0 0.0
    %1233 = vmatprep.subr.mxu0 0.0
    %1234 = vmatpush1.msra.mxu0 0.0
    %1235 = vmatprep.subr.mxu0 0.0
    %1236 = vmatpush1.msra.mxu0 0.0
    %1237 = vmatprep.subr.mxu0 0.0
    %1238 = vmatpush1.msra.mxu0 0.0
    %1239 = vmatprep.subr.mxu0 0.0
    %1240 = vmatpush1.msra.mxu0 0.0
    %1241 = vmatprep.subr.mxu0 0.0
    %1242 = vmatpush1.msra.mxu0 0.0
    %1243 = vmatprep.subr.mxu0 0.0
    %1244 = vmatpush1.msra.mxu0 0.0
    %1245 = vmatprep.subr.mxu0 0.0
    %1246 = vmatpush1.msra.mxu0 0.0
    %1247 = vmatprep.subr.mxu0 0.0
    %1248 = vmatpush1.msra.mxu0 0.0
    %1249 = vmatprep.subr.mxu0 0.0
    %1250 = vmatpush1.msra.mxu0 0.0
    %1251 = vmatprep.subr.mxu0 0.0
    %1252 = vmatpush1.msra.mxu0 0.0
    %1253 = vmatprep.mubr.f32.mxu0 0.0
    %1254 = vmatmul.mubr.f32.gmra.mrb[0].mxu0 %v110
    %v1255 = vpop.f32.mrb[0].mxu0
    %v1256 = vadd.f32 0.0, %v1255
    %v1257 = vpop.f32.mrb[0].mxu0
    %1258 = vmatprep.mubr.f32.mxu0 0.0
    %1259 = vmatmul.mubr.f32.gmra.mrb[0].mxu0 %v113
    %v1260 = vpop.f32.mrb[0].mxu0
    %v1261 = vadd.f32 0.0, %v1260
    %v1262 = vpop.f32.mrb[0].mxu0
    %1263 = vmatprep.mubr.f32.mxu0 0.0
    %1264 = vmatmul.mubr.f32.gmra.mrb[0].mxu0 %v116
    %v1265 = vpop.f32.mrb[0].mxu0
    %v1266 = vadd.f32 0.0, %v1265
    %v1267 = vpop.f32.mrb[0].mxu0
    %1268 = vdwg.mxu0
    %v1269 = vld [vmem:[%s0] sm:$0xff]
    %v1270 = vld [vmem:[%s0 + $0x8] sm:$0xff]
    %1271 = vset.pattern.permute.xlu0 0
    %1272 = vperm.xlu0 %1271, %v1269
    %v1273 = vpop.permute.xlu0 %1272
    %1274 = vset.pattern.permute.xlu0 0
    %1275 = vperm.xlu0 %1274, %v1270
    %v1276 = vpop.permute.xlu0 %1275
    %vm1277 = vcmp.eq.s32.totalorder %v1273, %v199
    %vm1278 = vcmp.eq.s32.totalorder %v1276, %v199
    %v1279 = vsel %vm1277, 1.0, 0.0
    %v1280 = vsel %vm1278, 1.0, 0.0
    %v1281 = vld [vmem:[%s9] sm:$0x1]
    %v1283 = vlaneseq
    %v1284 = vshrl.u32 %v1283, 7
    %v1285 = vsub.s32 0, %v1284
    %v1286 = vrot.slane %v1281, %v1285
    %v1289 = vsel %vm231, %v1279, 0
    %v1292 = vsel %vm231, %v1280, 0
    %v1295 = vsel %vm244, %v1266, 0
    %1297 = vmatprep.subr.mxu0 0.0
    %1298 = vmatpush1.msra.mxu0 %v1256
    %1299 = vmatprep.subr.mxu0 0.0
    %1300 = vmatpush1.msra.mxu0 %v1261
    %1301 = vmatprep.subr.mxu0 0.0
    %1302 = vmatpush1.msra.mxu0 %v1295
    %1303 = vmatprep.subr.mxu0 0.0
    %1304 = vmatpush1.msra.mxu0 0.0
    %1305 = vmatprep.subr.mxu0 0.0
    %1306 = vmatpush1.msra.mxu0 0.0
    %1307 = vmatprep.subr.mxu0 0.0
    %1308 = vmatpush1.msra.mxu0 0.0
    %1309 = vmatprep.subr.mxu0 0.0
    %1310 = vmatpush1.msra.mxu0 0.0
    %1311 = vmatprep.subr.mxu0 0.0
    %1312 = vmatpush1.msra.mxu0 0.0
    %1313 = vmatprep.subr.mxu0 0.0
    %1314 = vmatpush1.msra.mxu0 0.0
    %1315 = vmatprep.subr.mxu0 0.0
    %1316 = vmatpush1.msra.mxu0 0.0
    %1317 = vmatprep.subr.mxu0 0.0
    %1318 = vmatpush1.msra.mxu0 0.0
    %1319 = vmatprep.subr.mxu0 0.0
    %1320 = vmatpush1.msra.mxu0 0.0
    %1321 = vmatprep.subr.mxu0 0.0
    %1322 = vmatpush1.msra.mxu0 0.0
    %1323 = vmatprep.subr.mxu0 0.0
    %1324 = vmatpush1.msra.mxu0 0.0
    %1325 = vmatprep.subr.mxu0 0.0
    %1326 = vmatpush1.msra.mxu0 0.0
    %1327 = vmatprep.subr.mxu0 0.0
    %1328 = vmatpush1.msra.mxu0 0.0
    %1329 = vmatprep.subr.mxu0 0.0
    %1330 = vmatpush1.msra.mxu0 0.0
    %1331 = vmatprep.subr.mxu0 0.0
    %1332 = vmatpush1.msra.mxu0 0.0
    %1333 = vmatprep.subr.mxu0 0.0
    %1334 = vmatpush1.msra.mxu0 0.0
    %1335 = vmatprep.subr.mxu0 0.0
    %1336 = vmatpush1.msra.mxu0 0.0
    %1337 = vmatprep.subr.mxu0 0.0
    %1338 = vmatpush1.msra.mxu0 0.0
    %1339 = vmatprep.subr.mxu0 0.0
    %1340 = vmatpush1.msra.mxu0 0.0
    %1341 = vmatprep.subr.mxu0 0.0
    %1342 = vmatpush1.msra.mxu0 0.0
    %1343 = vmatprep.subr.mxu0 0.0
    %1344 = vmatpush1.msra.mxu0 0.0
    %1345 = vmatprep.subr.mxu0 0.0
    %1346 = vmatpush1.msra.mxu0 0.0
    %1347 = vmatprep.subr.mxu0 0.0
    %1348 = vmatpush1.msra.mxu0 0.0
    %1349 = vmatprep.subr.mxu0 0.0
    %1350 = vmatpush1.msra.mxu0 0.0
    %1351 = vmatprep.subr.mxu0 0.0
    %1352 = vmatpush1.msra.mxu0 0.0
    %1353 = vmatprep.subr.mxu0 0.0
    %1354 = vmatpush1.msra.mxu0 0.0
    %1355 = vmatprep.subr.mxu0 0.0
    %1356 = vmatpush1.msra.mxu0 0.0
    %1357 = vmatprep.subr.mxu0 0.0
    %1358 = vmatpush1.msra.mxu0 0.0
    %1359 = vmatprep.subr.mxu0 0.0
    %1360 = vmatpush1.msra.mxu0 0.0
    %1361 = vmatprep.mubr.f32.mxu0 0.0
    %1362 = vmatmul.mubr.f32.gmra.mrb[0].mxu0 %v1289
    %v1363 = vpop.f32.mrb[0].mxu0
    %v1364 = vadd.f32 %v1286, %v1363
    %v1365 = vpop.f32.mrb[0].mxu0
    %1366 = vmatprep.mubr.f32.mxu0 0.0
    %1367 = vmatmul.mubr.f32.gmra.mrb[0].mxu0 %v1292
    %v1368 = vpop.f32.mrb[0].mxu0
    %v1369 = vadd.f32 %v1286, %v1368
    %v1370 = vpop.f32.mrb[0].mxu0
    %1371 = vdwg.mxu0
    %v1372 = vld [vmem:[#allocation2] sm:$0xff]
    %v1373 = vld [vmem:[#allocation2 + $0x8] sm:$0xff]
    %v1374 = vld [vmem:[#allocation9] sm:$0xff]
    %v1375 = vld [vmem:[#allocation9 + $0x8] sm:$0xff]
    %v1376 = vld [vmem:[#allocation9 + $0x10] sm:$0xff]
    %v1377 = vld [vmem:[#allocation9 + $0x18] sm:$0xff]
    %v1379 = vsel %vm108, %v1372, 0
    %v1382 = vsel %vm108, %v1373, 0
    %1384 = vmatprep.subr.mxu0 0.0
    %1385 = vmatpush1.msra.mxu0 %v1374
    %1386 = vmatprep.subr.mxu0 0.0
    %1387 = vmatpush1.msra.mxu0 %v1375
    %1388 = vmatprep.subr.mxu0 0.0
    %1389 = vmatpush1.msra.mxu0 %v1376
    %1390 = vmatprep.subr.mxu0 0.0
    %1391 = vmatpush1.msra.mxu0 %v1377
    %1392 = vmatprep.subr.mxu0 0.0
    %1393 = vmatpush1.msra.mxu0 0.0
    %1394 = vmatprep.subr.mxu0 0.0
    %1395 = vmatpush1.msra.mxu0 0.0
    %1396 = vmatprep.subr.mxu0 0.0
    %1397 = vmatpush1.msra.mxu0 0.0
    %1398 = vmatprep.subr.mxu0 0.0
    %1399 = vmatpush1.msra.mxu0 0.0
    %1400 = vmatprep.subr.mxu0 0.0
    %1401 = vmatpush1.msra.mxu0 0.0
    %1402 = vmatprep.subr.mxu0 0.0
    %1403 = vmatpush1.msra.mxu0 0.0
    %1404 = vmatprep.subr.mxu0 0.0
    %1405 = vmatpush1.msra.mxu0 0.0
    %1406 = vmatprep.subr.mxu0 0.0
    %1407 = vmatpush1.msra.mxu0 0.0
    %1408 = vmatprep.subr.mxu0 0.0
    %1409 = vmatpush1.msra.mxu0 0.0
    %1410 = vmatprep.subr.mxu0 0.0
    %1411 = vmatpush1.msra.mxu0 0.0
    %1412 = vmatprep.subr.mxu0 0.0
    %1413 = vmatpush1.msra.mxu0 0.0
    %1414 = vmatprep.subr.mxu0 0.0
    %1415 = vmatpush1.msra.mxu0 0.0
    %1416 = vmatprep.subr.mxu0 0.0
    %1417 = vmatpush1.msra.mxu0 0.0
    %1418 = vmatprep.subr.mxu0 0.0
    %1419 = vmatpush1.msra.mxu0 0.0
    %1420 = vmatprep.subr.mxu0 0.0
    %1421 = vmatpush1.msra.mxu0 0.0
    %1422 = vmatprep.subr.mxu0 0.0
    %1423 = vmatpush1.msra.mxu0 0.0
    %1424 = vmatprep.subr.mxu0 0.0
    %1425 = vmatpush1.msra.mxu0 0.0
    %1426 = vmatprep.subr.mxu0 0.0
    %1427 = vmatpush1.msra.mxu0 0.0
    %1428 = vmatprep.subr.mxu0 0.0
    %1429 = vmatpush1.msra.mxu0 0.0
    %1430 = vmatprep.subr.mxu0 0.0
    %1431 = vmatpush1.msra.mxu0 0.0
    %1432 = vmatprep.subr.mxu0 0.0
    %1433 = vmatpush1.msra.mxu0 0.0
    %1434 = vmatprep.subr.mxu0 0.0
    %1435 = vmatpush1.msra.mxu0 0.0
    %1436 = vmatprep.subr.mxu0 0.0
    %1437 = vmatpush1.msra.mxu0 0.0
    %1438 = vmatprep.subr.mxu0 0.0
    %1439 = vmatpush1.msra.mxu0 0.0
    %1440 = vmatprep.subr.mxu0 0.0
    %1441 = vmatpush1.msra.mxu0 0.0
    %1442 = vmatprep.subr.mxu0 0.0
    %1443 = vmatpush1.msra.mxu0 0.0
    %1444 = vmatprep.subr.mxu0 0.0
    %1445 = vmatpush1.msra.mxu0 0.0
    %1446 = vmatprep.subr.mxu0 0.0
    %1447 = vmatpush1.msra.mxu0 0.0
    %1448 = vmatprep.mubr.f32.mxu0 0.0
    %1449 = vmatmul.mubr.f32.gmra.mrb[0].mxu0 %v1379
    %v1450 = vpop.f32.mrb[0].mxu0
    %v1451 = vadd.f32 0.0, %v1450
    %v1452 = vpop.f32.mrb[0].mxu0
    %1453 = vmatprep.mubr.f32.mxu0 0.0
    %1454 = vmatmul.mubr.f32.gmra.mrb[0].mxu0 %v1382
    %v1455 = vpop.f32.mrb[0].mxu0
    %v1456 = vadd.f32 0.0, %v1455
    %v1457 = vpop.f32.mrb[0].mxu0
    %1458 = vdwg.mxu0
    %v1459 = vld [vmem:[#allocation3] sm:$0xff]
    %v1460 = vld [vmem:[#allocation3 + $0x8] sm:$0xff]
    %v1461 = vld [vmem:[#allocation10] sm:$0xff]
    %v1462 = vld [vmem:[#allocation10 + $0x8] sm:$0xff]
    %v1463 = vld [vmem:[#allocation10 + $0x10] sm:$0xff]
    %v1464 = vld [vmem:[#allocation10 + $0x18] sm:$0xff]
    %v1466 = vsel %vm108, %v1459, 0
    %v1469 = vsel %vm108, %v1460, 0
    %1471 = vmatprep.subr.mxu0 0.0
    %1472 = vmatpush1.msra.mxu0 %v1461
    %1473 = vmatprep.subr.mxu0 0.0
    %1474 = vmatpush1.msra.mxu0 %v1462
    %1475 = vmatprep.subr.mxu0 0.0
    %1476 = vmatpush1.msra.mxu0 %v1463
    %1477 = vmatprep.subr.mxu0 0.0
    %1478 = vmatpush1.msra.mxu0 %v1464
    %1479 = vmatprep.subr.mxu0 0.0
    %1480 = vmatpush1.msra.mxu0 0.0
    %1481 = vmatprep.subr.mxu0 0.0
    %1482 = vmatpush1.msra.mxu0 0.0
    %1483 = vmatprep.subr.mxu0 0.0
    %1484 = vmatpush1.msra.mxu0 0.0
    %1485 = vmatprep.subr.mxu0 0.0
    %1486 = vmatpush1.msra.mxu0 0.0
    %1487 = vmatprep.subr.mxu0 0.0
    %1488 = vmatpush1.msra.mxu0 0.0
    %1489 = vmatprep.subr.mxu0 0.0
    %1490 = vmatpush1.msra.mxu0 0.0
    %1491 = vmatprep.subr.mxu0 0.0
    %1492 = vmatpush1.msra.mxu0 0.0
    %1493 = vmatprep.subr.mxu0 0.0
    %1494 = vmatpush1.msra.mxu0 0.0
    %1495 = vmatprep.subr.mxu0 0.0
    %1496 = vmatpush1.msra.mxu0 0.0
    %1497 = vmatprep.subr.mxu0 0.0
    %1498 = vmatpush1.msra.mxu0 0.0
    %1499 = vmatprep.subr.mxu0 0.0
    %1500 = vmatpush1.msra.mxu0 0.0
    %1501 = vmatprep.subr.mxu0 0.0
    %1502 = vmatpush1.msra.mxu0 0.0
    %1503 = vmatprep.subr.mxu0 0.0
    %1504 = vmatpush1.msra.mxu0 0.0
    %1505 = vmatprep.subr.mxu0 0.0
    %1506 = vmatpush1.msra.mxu0 0.0
    %1507 = vmatprep.subr.mxu0 0.0
    %1508 = vmatpush1.msra.mxu0 0.0
    %1509 = vmatprep.subr.mxu0 0.0
    %1510 = vmatpush1.msra.mxu0 0.0
    %1511 = vmatprep.subr.mxu0 0.0
    %1512 = vmatpush1.msra.mxu0 0.0
    %1513 = vmatprep.subr.mxu0 0.0
    %1514 = vmatpush1.msra.mxu0 0.0
    %1515 = vmatprep.subr.mxu0 0.0
    %1516 = vmatpush1.msra.mxu0 0.0
    %1517 = vmatprep.subr.mxu0 0.0
    %1518 = vmatpush1.msra.mxu0 0.0
    %1519 = vmatprep.subr.mxu0 0.0
    %1520 = vmatpush1.msra.mxu0 0.0
    %1521 = vmatprep.subr.mxu0 0.0
    %1522 = vmatpush1.msra.mxu0 0.0
    %1523 = vmatprep.subr.mxu0 0.0
    %1524 = vmatpush1.msra.mxu0 0.0
    %1525 = vmatprep.subr.mxu0 0.0
    %1526 = vmatpush1.msra.mxu0 0.0
    %1527 = vmatprep.subr.mxu0 0.0
    %1528 = vmatpush1.msra.mxu0 0.0
    %1529 = vmatprep.subr.mxu0 0.0
    %1530 = vmatpush1.msra.mxu0 0.0
    %1531 = vmatprep.subr.mxu0 0.0
    %1532 = vmatpush1.msra.mxu0 0.0
    %1533 = vmatprep.subr.mxu0 0.0
    %1534 = vmatpush1.msra.mxu0 0.0
    %1535 = vmatprep.mubr.f32.mxu0 0.0
    %1536 = vmatmul.mubr.f32.gmra.mrb[0].mxu0 %v1466
    %v1537 = vpop.f32.mrb[0].mxu0
    %v1538 = vadd.f32 0.0, %v1537
    %v1539 = vpop.f32.mrb[0].mxu0
    %1540 = vmatprep.mubr.f32.mxu0 0.0
    %1541 = vmatmul.mubr.f32.gmra.mrb[0].mxu0 %v1469
    %v1542 = vpop.f32.mrb[0].mxu0
    %v1543 = vadd.f32 0.0, %v1542
    %v1544 = vpop.f32.mrb[0].mxu0
    %1545 = vdwg.mxu0
    %v1546 = vadd.f32 %v1364, %v1451
    %v1547 = vadd.f32 %v1369, %v1456
    %v1548 = vadd.f32 %v1546, %v1538
    %v1549 = vadd.f32 %v1547, %v1543
    %v1550 = vtanh.pop %v1548
    %v1551 = vtanh.pop %v1549
    %v1553 = vrot.slane %v1550, 2
    %v1555 = vmax.f32 %v1550, %v1553
    %v1556 = vrot.slane %v1550, 4
    %v1558 = vmax.f32 %v1555, %v1556
    %v1559 = vrot.slane %v1550, 6
    %v1561 = vmax.f32 %v1558, %v1559
    %v1562 = vmax.f32 %v1561, %v1551
    %v1564 = vrot.slane %v1551, 2
    %v1566 = vmax.f32 %v1562, %v1564
    %v1567 = vrot.slane %v1551, 4
    %v1569 = vmax.f32 %v1566, %v1567
    %v1570 = vrot.slane %v1551, 6
    %v1572 = vmax.f32 %v1569, %v1570
    %v1573 = vld [vmem:[%s10] sm:$0x1]
    %v1575 = vlaneseq
    %v1576 = vshrl.u32 %v1575, 7
    %v1577 = vsub.s32 0, %v1576
    %v1578 = vrot.slane %v1573, %v1577
    %v1580 = vmul.f32 %v1572, %v1578
    %v1581 = vsel %vm441, %v1580, 0.0
    %1582 = vadd.xlane.f32.xlu0 %v1581
    %v1583 = vpop.xlane.xlu0 %1582
    %s1584 = sld [smem:[#allocation4]]
    %v1585 = vstv %s1584
    %v1586 = vadd.f32 %v1583, %v1585
    %v1587 = vxor.u32 %v1586, 2147483648
    %v1588 = vmul.f32 %v1587, 1.442695
    %v1589 = vpow.pop %v1588
    %v1590 = vadd.f32 %v1589, 1.0
    %v1591 = vrcp.pop %v1590
    %v1592 = vmul.f32 1.0, %v1591
    %vm1593 = vcmask 1024
    %1594 = vst.msk [vmem:[%s12] sm:$0x3] %vm1593, %v1592
    // Predicated region
    $region66: #{tpu_custom_call.1} parent=1 // pred_check
      _
    $region67: #{tpu_custom_call.1} parent=1 // pred_check_branch
      %1596 = sbr.rel (0) target = $region69
    $region68: #{tpu_custom_call.1} parent=1 // pred_region
      _
    $region69: #{tpu_custom_call.1} parent=1 // pred_fallthru
      _
    // Predicated region
    $region70: #{tpu_custom_call.1} parent=1 // pred_check
      _
    $region71: #{tpu_custom_call.1} parent=1 // pred_check_branch
      %1598 = sbr.rel (0) target = $region73
    $region72: #{tpu_custom_call.1} parent=1 // pred_region
      _
    $region73: #{tpu_custom_call.1} parent=1 // pred_fallthru
      _
    %1599 = vsyncpa [#allocation6], 1
    %1600 = vsyncpa [#allocation8], 1
    %1601 = vsyncpa [#allocation11], 1

</llo_original>
